<compile_context>
chip_gen: v7x
topology: tpu7x:2x2x1
jax: 0.10.0
libtpu: 0.0.40
codegen_flags: <defaults>
</compile_context>

<pallas_src>
import jax
import jax.numpy as jnp
from jax import lax
from jax.experimental import pallas as pl
from jax.experimental.pallas import tpu as pltpu

C_IN, C_OUT, KH, KW = 3, 6, 3, 3
K_COLS = KH * KW * C_IN + 1  # 27 conv taps + 1 bias column


def conv2d_kernel(x_ref, w_ref, o_ref):
    # x_ref: (C_IN, H, W)        VMEM, one image (batch dim squeezed by BlockSpec)
    # w_ref: (C_OUT, K_COLS)     VMEM, last column = bias
    # o_ref: (C_OUT, H_out*W_out) VMEM, lane-dense output
    _, h, w = x_ref.shape
    h_out = h - KH + 1
    w_out = w - KW + 1
    p = h_out * w_out

    w_mat = w_ref[...].astype(jnp.float32)          # (C_OUT, 28), loaded once
    xi = x_ref[...].astype(jnp.float32)             # (C_IN, H, W)

    # im2col: 27 shifted taps + a ones row carrying the bias term.
    cols = []
    for kh in range(KH):
        for kw in range(KW):
            tap = xi[:, kh:kh + h_out, kw:kw + w_out]   # (C_IN, H_out, W_out)
            cols.append(tap.reshape(C_IN, p))
    cols.append(jnp.ones((1, p), jnp.float32))
    im2col = jnp.concatenate(cols, axis=0)          # (28, P)

    # Single MXU matmul per image: (C_OUT,28) @ (28,P) -> (C_OUT,P), bias included.
    o_ref[...] = jnp.dot(w_mat, im2col,
                         preferred_element_type=jnp.float32).astype(o_ref.dtype)


def conv2d_pallas(x_nchw, w_oihw, bias):
    n, c, h, w = x_nchw.shape
    assert c == C_IN
    h_out, w_out = h - KH + 1, w - KW + 1
    p = h_out * w_out

    # Weight prep (tiny, XLA side): (O,I,KH,KW) -> (O, KH*KW*C_IN) with the same
    # (kh, kw, ci) ordering as the im2col rows, then append the bias column.
    w_mat = jnp.transpose(w_oihw, (0, 2, 3, 1)).reshape(C_OUT, KH * KW * C_IN)
    w_aug = jnp.concatenate([w_mat, bias[:, None]], axis=1)   # (C_OUT, 28)

    out_flat = pl.pallas_call(
        conv2d_kernel,
        out_shape=jax.ShapeDtypeStruct((n, C_OUT, p), x_nchw.dtype),
        grid=(n,),  # one image per grid step; pipelined and megacore-parallel
        in_specs=[
            pl.BlockSpec((None, C_IN, h, w), lambda i: (i, 0, 0, 0)),
            pl.BlockSpec((C_OUT, K_COLS), lambda i: (0, 0)),
        ],
        out_specs=pl.BlockSpec((None, C_OUT, p), lambda i: (i, 0, 0)),
        compiler_params=pltpu.CompilerParams(
            dimension_semantics=("parallel",)),
    )(x_nchw, w_aug)

    # Pure-metadata reshape: (N, C_OUT, H_out*W_out) -> NCHW.
    return out_flat.reshape(n, C_OUT, h_out, w_out)


def init_params(key):
    # Deterministic init mimicking PyTorch Conv2d defaults:
    # kaiming-uniform bound = 1/sqrt(fan_in), fan_in = C_IN * KH * KW.
    kw_, kb_ = jax.random.split(key)
    fan_in = C_IN * KH * KW
    bound = 1.0 / jnp.sqrt(jnp.float32(fan_in))
    weight = jax.random.uniform(kw_, (C_OUT, C_IN, KH, KW), jnp.float32,
                                minval=-bound, maxval=bound)
    bias = jax.random.uniform(kb_, (C_OUT,), jnp.float32,
                              minval=-bound, maxval=bound)
    return weight, bias


if __name__ == "__main__":
    key = jax.random.PRNGKey(0)
    k_x, k_p = jax.random.split(key)

    # Small NCHW input consistent with the module: batch=2, C=3, H=W=16.
    x = jax.random.normal(k_x, (2, C_IN, 16, 16), jnp.float32)
    weight, bias = init_params(k_p)

    out = conv2d_pallas(x, weight, bias)
    out = jax.block_until_ready(out)

    # Reference check against XLA convolution (same semantics as torch Conv2d).
    ref = lax.conv_general_dilated(
        x, weight, window_strides=(1, 1), padding="VALID",
        dimension_numbers=("NCHW", "OIHW", "NCHW")) + bias[None, :, None, None]
    assert out.shape == (2, C_OUT, 14, 14)
    assert jnp.allclose(out, ref, atol=1e-5, rtol=1e-5)

    print("KERNEL_OK")
</pallas_src>

<mosaic_0001>
module attributes {stable_mosaic.version = 11 : i64} {
  func.func @conv2d_kernel(%arg0: i32, %arg1: memref<1x3x16x16xf32, #tpu.memory_space<vmem>>, %arg2: memref<6x28xf32, #tpu.memory_space<vmem>>, %arg3: memref<1x6x196xf32, #tpu.memory_space<vmem>>) attributes {dimension_semantics = [#tpu.dimension_semantics<parallel>], iteration_bounds = array<i64: 2>, scalar_prefetch = 0 : i64, scratch_operands = 0 : i64, tpu.core_type = #tpu.core_type<tc>, window_params = [{transform_indices = @transform_0, window_bounds = array<i64: 1, 3, 16, 16>}, {pipeline_mode = #tpu.pipeline_mode<synchronous>, transform_indices = @transform_1, window_bounds = array<i64: 6, 28>}, {transform_indices = @transform_2, window_bounds = array<i64: 1, 6, 196>}]} {
    %c0 = arith.constant 0 : index
    %c0_0 = arith.constant 0 : index
    %0 = vector.load %arg2[%c0, %c0_0] : memref<6x28xf32, #tpu.memory_space<vmem>>, vector<6x28xf32>
    %c0_1 = arith.constant 0 : index
    %c0_2 = arith.constant 0 : index
    %c0_3 = arith.constant 0 : index
    %c0_4 = arith.constant 0 : index
    %1 = vector.load %arg1[%c0_1, %c0_2, %c0_3, %c0_4] : memref<1x3x16x16xf32, #tpu.memory_space<vmem>>, vector<1x3x16x16xf32>
    %2 = vector.shape_cast %1 : vector<1x3x16x16xf32> to vector<3x16x16xf32>
    %3 = vector.extract_strided_slice %2 {offsets = [0, 0, 0], sizes = [3, 14, 14], strides = [1, 1, 1]} : vector<3x16x16xf32> to vector<3x14x14xf32>
    %4 = vector.shape_cast %3 : vector<3x14x14xf32> to vector<3x196xf32>
    %5 = vector.extract_strided_slice %2 {offsets = [0, 0, 1], sizes = [3, 14, 14], strides = [1, 1, 1]} : vector<3x16x16xf32> to vector<3x14x14xf32>
    %6 = vector.shape_cast %5 : vector<3x14x14xf32> to vector<3x196xf32>
    %7 = vector.extract_strided_slice %2 {offsets = [0, 0, 2], sizes = [3, 14, 14], strides = [1, 1, 1]} : vector<3x16x16xf32> to vector<3x14x14xf32>
    %8 = vector.shape_cast %7 : vector<3x14x14xf32> to vector<3x196xf32>
    %9 = vector.extract_strided_slice %2 {offsets = [0, 1, 0], sizes = [3, 14, 14], strides = [1, 1, 1]} : vector<3x16x16xf32> to vector<3x14x14xf32>
    %10 = vector.shape_cast %9 : vector<3x14x14xf32> to vector<3x196xf32>
    %11 = vector.extract_strided_slice %2 {offsets = [0, 1, 1], sizes = [3, 14, 14], strides = [1, 1, 1]} : vector<3x16x16xf32> to vector<3x14x14xf32>
    %12 = vector.shape_cast %11 : vector<3x14x14xf32> to vector<3x196xf32>
    %13 = vector.extract_strided_slice %2 {offsets = [0, 1, 2], sizes = [3, 14, 14], strides = [1, 1, 1]} : vector<3x16x16xf32> to vector<3x14x14xf32>
    %14 = vector.shape_cast %13 : vector<3x14x14xf32> to vector<3x196xf32>
    %15 = vector.extract_strided_slice %2 {offsets = [0, 2, 0], sizes = [3, 14, 14], strides = [1, 1, 1]} : vector<3x16x16xf32> to vector<3x14x14xf32>
    %16 = vector.shape_cast %15 : vector<3x14x14xf32> to vector<3x196xf32>
    %17 = vector.extract_strided_slice %2 {offsets = [0, 2, 1], sizes = [3, 14, 14], strides = [1, 1, 1]} : vector<3x16x16xf32> to vector<3x14x14xf32>
    %18 = vector.shape_cast %17 : vector<3x14x14xf32> to vector<3x196xf32>
    %19 = vector.extract_strided_slice %2 {offsets = [0, 2, 2], sizes = [3, 14, 14], strides = [1, 1, 1]} : vector<3x16x16xf32> to vector<3x14x14xf32>
    %20 = vector.shape_cast %19 : vector<3x14x14xf32> to vector<3x196xf32>
    %cst = arith.constant 1.000000e+00 : f32
    %21 = vector.broadcast %cst : f32 to vector<1x196xf32>
    %22 = tpu.concatenate %4, %6, %8, %10, %12, %14, %16, %18, %20, %21 in 0 : vector<3x196xf32>, vector<3x196xf32>, vector<3x196xf32>, vector<3x196xf32>, vector<3x196xf32>, vector<3x196xf32>, vector<3x196xf32>, vector<3x196xf32>, vector<3x196xf32>, vector<1x196xf32> -> vector<28x196xf32>
    %cst_5 = arith.constant dense<0.000000e+00> : vector<6x196xf32>
    %23 = tpu.matmul %0, %22, %cst_5 {dimension_numbers = #tpu.dot_dimension_numbers<[1], [0], [0], [1], [0, 0, 1, 1], [], []>} : vector<6x28xf32>, vector<28x196xf32>, vector<6x196xf32> -> vector<6x196xf32>
    %c0_6 = arith.constant 0 : index
    %c0_7 = arith.constant 0 : index
    %c0_8 = arith.constant 0 : index
    %24 = vector.load %arg3[%c0_6, %c0_7, %c0_8] : memref<1x6x196xf32, #tpu.memory_space<vmem>>, vector<1x6x196xf32>
    %25 = vector.shape_cast %24 : vector<1x6x196xf32> to vector<6x196xf32>
    %26 = vector.shape_cast %23 : vector<6x196xf32> to vector<1x6x196xf32>
    tpu.vector_store %arg3[%c0_6, %c0_7, %c0_8], %26 {strides = array<i32>} : memref<1x6x196xf32, #tpu.memory_space<vmem>>, vector<1x6x196xf32>,
    return
  }
  func.func @transform_0(%arg0: i32) -> (i32, i32, i32, i32) {
    %c0_i32 = arith.constant 0 : i32
    %c0_i32_0 = arith.constant 0 : i32
    %c0_i32_1 = arith.constant 0 : i32
    %c0_i32_2 = arith.constant 0 : i32
    return %arg0, %c0_i32, %c0_i32_0, %c0_i32_1 : i32, i32, i32, i32
  }
  func.func @transform_1(%arg0: i32) -> (i32, i32) {
    %c0_i32 = arith.constant 0 : i32
    %c0_i32_0 = arith.constant 0 : i32
    %c0_i32_1 = arith.constant 0 : i32
    return %c0_i32, %c0_i32_0 : i32, i32
  }
  func.func @transform_2(%arg0: i32) -> (i32, i32, i32) {
    %c0_i32 = arith.constant 0 : i32
    %c0_i32_0 = arith.constant 0 : i32
    %c0_i32_1 = arith.constant 0 : i32
    return %arg0, %c0_i32, %c0_i32_0 : i32, i32, i32
  }
}

</mosaic_0001>

<llo_original>
// kernel: tpu_custom_call.1
$region0: #{tpu_custom_call.1}
  #allocation0 [shape = 'u32[]', space=smem, size = 0x4, offset = 0x4, fixed_abs, tag = 'smem constant byte address 0x4 - core index']
  #allocation1 [shape = 'u32[144,128]{1,0:T(1,128)}', space=vmem, size = 0x12000, scoped, tag = 'internal scratch']
  %s0 = inlined_call_operand.hbm [shape: f32[2,3,16,16], index: 0, kind: input, shape index: {}]
  %s1 = inlined_call_operand.hbm [shape: f32[6,28], index: 1, kind: input, shape index: {}]
  %s2 = inlined_call_operand.vmem [shape: f32[2,6,196], index: 2, kind: output, shape index: {}]
  %s3 = sld [smem:[#allocation0]]
  $region49: #{tpu_custom_call.1} parent=0
    _
  %s5 = ssub.s32 1, %s3
  %s6 = scalar_select 0, %s5, %s3
  $region1: #{tpu_custom_call.1} parent=0
    #allocation2 [shape = 'u8[49152]{0}', space=vmem, size = 0xc000, scoped, tag = 'input window, operand 0']
    #allocation3 [shape = 's32[2]{0}', space=sflag, size = 0x8, scoped, tag = 'scoped memory for tpu_custom_call.1']
    #allocation4 [shape = 'u8[4096]{0}', space=vmem, size = 0x1000, scoped, tag = 'input window, operand 1, single buffered']
    #allocation5 [shape = 's32[1]{0}', space=sflag, size = 0x4, scoped, tag = 'scoped memory for tpu_custom_call.1']
    %7 = vsyncpa [#allocation3], 0
    %s8 = scalar_lea.sflag [#allocation3], 1
    %9 = vsyncpa %s8, 0
    %10 = vsyncpa [#allocation5], 0
    loop: start=0, step=1, limit=4
    $region2: #{tpu_custom_call.1} parent=1 // loop_pre_header
      _
    $region3: #{tpu_custom_call.1} parent=1 // loop_header
      %s12 = sphi 0, %s16
      %p13 = scmp.ge.s32.totalorder %s12, 4
      %s22 = sphi 0, %s24
      %s25 = sphi 0, %s22
      %s26 = sphi 0, %s25
      %s42 = sphi 0, %s26
      %s46 = sphi 0, %s46
      %s48 = sphi 0, %s46
      %s49 = sphi 0, %s48
      %s63 = sphi 0, %s49
      %s69 = sphi 0, %s71
      %s72 = sphi 0, %s69
      %s73 = sphi 0, %s72
      %s89 = sphi 0, %s73
    $region4: #{tpu_custom_call.1} parent=1 // loop_header_branch
      %15 = sbr.rel (%p13) target = $region8
    $region5: #{tpu_custom_call.1} parent=1 // loop_body
      %s17 = ssub.s32 %s12, 1
      %s18 = ssub.s32 %s12, 2
      %s19 = sadd.s32 %s12, 1
      %s20 = ssub.s32 %s12, %s19
      %p21 = scmp.eq.s32.totalorder %s20, 0
      %s23 = sadd.s32 %s22, 1
      %s24 = scalar_select %p21, %s22, %s23
      %p27 = pneg %p21
      %p28 = scmp.eq.s32.totalorder %s12, 1
      %p29 = por %p27, %p28
      %p30 = scmp.ne.s32.totalorder %s22, %s25
      %p31 = scmp.eq.s32.totalorder %s12, 0
      %p32 = por %p30, %p31
      %p33 = scmp.ne.s32.totalorder %s22, %s25
      %p34 = scmp.eq.s32.totalorder %s17, 1
      %p35 = por %p33, %p34
      %p36 = scmp.ne.s32.totalorder %s25, %s26
      %p37 = scmp.eq.s32.totalorder %s17, 0
      %p38 = por %p36, %p37
      %p39 = scmp.ne.s32.totalorder %s25, %s26
      %p40 = scmp.eq.s32.totalorder %s18, 1
      %p41 = por %p39, %p40
      %p43 = scmp.ne.s32.totalorder %s26, %s42
      %p44 = scmp.eq.s32.totalorder %s18, 0
      %p45 = por %p43, %p44
      %s47 = sadd.s32 %s46, 1
      %p50 = scmp.eq.s32.totalorder %s12, 1
      %p51 = scmp.ne.s32.totalorder %s46, %s48
      %p52 = scmp.eq.s32.totalorder %s12, 0
      %p53 = por %p51, %p52
      %p54 = scmp.ne.s32.totalorder %s46, %s48
      %p55 = scmp.eq.s32.totalorder %s17, 1
      %p56 = por %p54, %p55
      %p57 = scmp.ne.s32.totalorder %s48, %s49
      %p58 = scmp.eq.s32.totalorder %s17, 0
      %p59 = por %p57, %p58
      %p60 = scmp.ne.s32.totalorder %s48, %s49
      %p61 = scmp.eq.s32.totalorder %s18, 1
      %p62 = por %p60, %p61
      %p64 = scmp.ne.s32.totalorder %s49, %s63
      %p65 = scmp.eq.s32.totalorder %s18, 0
      %p66 = por %p64, %p65
      %s67 = ssub.s32 %s12, %s19
      %p68 = scmp.eq.s32.totalorder %s67, 0
      %s70 = sadd.s32 %s69, 1
      %s71 = scalar_select %p68, %s69, %s70
      %p74 = pneg %p68
      %p75 = scmp.eq.s32.totalorder %s12, 1
      %p76 = por %p74, %p75
      %p77 = scmp.ne.s32.totalorder %s69, %s72
      %p78 = scmp.eq.s32.totalorder %s12, 0
      %p79 = por %p77, %p78
      %p80 = scmp.ne.s32.totalorder %s69, %s72
      %p81 = scmp.eq.s32.totalorder %s17, 1
      %p82 = por %p80, %p81
      %p83 = scmp.ne.s32.totalorder %s72, %s73
      %p84 = scmp.eq.s32.totalorder %s17, 0
      %p85 = por %p83, %p84
      %p86 = scmp.ne.s32.totalorder %s72, %s73
      %p87 = scmp.eq.s32.totalorder %s18, 1
      %p88 = por %p86, %p87
      %p90 = scmp.ne.s32.totalorder %s73, %s89
      %p91 = scmp.eq.s32.totalorder %s18, 0
      %p92 = por %p90, %p91
      %p93 = scmp.le.s32.totalorder 1, %s12
      %p94 = scmp.lt.s32.totalorder %s12, 3
      %p95 = pnand %p93, %p94
      %p96 = pneg %p95
      // Predicated region
      $region9: #{tpu_custom_call.1} parent=5 // pred_check
        _
      $region10: #{tpu_custom_call.1} parent=5 // pred_check_branch
        %98 = sbr.rel (%p95) target = $region12
      $region11: #{tpu_custom_call.1} parent=5 // pred_region
        %s99 = ssub.s32 %s12, 1
        // Predicated region
        $region13: #{tpu_custom_call.1} parent=11 // pred_check
          %p100 = pneg %p59
        $region14: #{tpu_custom_call.1} parent=11 // pred_check_branch
          %102 = sbr.rel (%p100) target = $region16
        $region15: #{tpu_custom_call.1} parent=11 // pred_region
          %s104 = ssub.s32 128, 128
          %105 = vsyncadd [#allocation5], %s104
          %s107 = sshll.u32 [#allocation4], 4
          %s108 = int_to_ptr.vmem [resolvable:$true] %s107
          %110 = dma.hbm_to_vmem [thread:$0]  %s1, 128, %s108, [#allocation5]
        $region16: #{tpu_custom_call.1} parent=11 // pred_fallthru
          _
      $region12: #{tpu_custom_call.1} parent=5 // pred_fallthru
        _
      %p111 = scmp.lt.s32.totalorder %s12, 2
      // Predicated region
      $region17: #{tpu_custom_call.1} parent=5 // pred_check
        %p112 = pneg %p111
      $region18: #{tpu_custom_call.1} parent=5 // pred_check_branch
        %114 = sbr.rel (%p112) target = $region20
      $region19: #{tpu_custom_call.1} parent=5 // pred_region
        // Predicated region
        $region21: #{tpu_custom_call.1} parent=19 // pred_check
          %p115 = pneg %p32
        $region22: #{tpu_custom_call.1} parent=19 // pred_check_branch
          %117 = sbr.rel (%p115) target = $region24
        $region23: #{tpu_custom_call.1} parent=19 // pred_region
          %s118 = sand.u32 %s22, 1
          %s119 = scalar_lea.sflag [#allocation3], %s118
          %s120 = sand.u32 %s22, 1
          %s121 = smul.addr %s120, 48
          %s122 = scalar_lea.vmem [#allocation2], %s121
          %s124 = ssub.s32 768, 768
          %125 = vsyncadd %s119, %s124
          %s126 = smul.addr %s12, 6
          %s127 = smul.addr %s126, 128
          %s128 = scalar_lea.hbm %s0, %s127
          %s129 = sshll.u32 %s122, 4
          %s130 = int_to_ptr.vmem [resolvable:$true] %s129
          %135 = dma.hbm_to_vmem [thread:$0]  %s128, 768, %s130, %s119, 128, 128, 8
        $region24: #{tpu_custom_call.1} parent=19 // pred_fallthru
          _
      $region20: #{tpu_custom_call.1} parent=5 // pred_fallthru
        _
      %p136 = scmp.le.s32.totalorder 1, %s12
      %p137 = scmp.lt.s32.totalorder %s12, 3
      %p138 = pnand %p136, %p137
      %p139 = pneg %p138
      // Predicated region
      $region25: #{tpu_custom_call.1} parent=5 // pred_check
        _
      $region26: #{tpu_custom_call.1} parent=5 // pred_check_branch
        %141 = sbr.rel (%p138) target = $region28
      $region27: #{tpu_custom_call.1} parent=5 // pred_region
        %s142 = ssub.s32 %s12, 1
        %s143 = sand.u32 %s25, 1
        %s144 = scalar_lea.sflag [#allocation3], %s143
        %s145 = sand.u32 %s25, 1
        %s146 = smul.addr %s145, 48
        %s147 = scalar_lea.vmem [#allocation2], %s146
        // Predicated region
        $region29: #{tpu_custom_call.1} parent=27 // pred_check
          %p148 = pneg %p38
        $region30: #{tpu_custom_call.1} parent=27 // pred_check_branch
          %150 = sbr.rel (%p148) target = $region32
        $region31: #{tpu_custom_call.1} parent=27 // pred_region
          %151 = dma.done %s144, 768
        $region32: #{tpu_custom_call.1} parent=27 // pred_fallthru
          _
        // Predicated region
        $region33: #{tpu_custom_call.1} parent=27 // pred_check
          %p152 = pneg %p59
        $region34: #{tpu_custom_call.1} parent=27 // pred_check_branch
          %154 = sbr.rel (%p152) target = $region36
        $region35: #{tpu_custom_call.1} parent=27 // pred_region
          %155 = dma.done [#allocation5], 128
        $region36: #{tpu_custom_call.1} parent=27 // pred_fallthru
          _
        %s156 = sand.u32 %s25, 1
        %s157 = scalar_lea.sflag [#allocation3], %s156
        %s158 = sand.u32 %s25, 1
        %s159 = smul.addr %s158, 48
        %s160 = scalar_lea.vmem [#allocation2], %s159
        %p161 = pneg %p38
        %p162 = pneg %p35
        %p163 = pneg %p59
        %p164 = pneg %p56
        %p165 = pneg %p85
        %p166 = pneg %p82
        %p167 = scmp.lt.s32.totalorder %s17, 1
        %s168 = scalar_select %p167, %s17, 1
        %s169 = smul.addr %s168, 2
        %s170 = smul.addr %s169, 8
        %s171 = scalar_lea.vmem %s2, %s170
        %p172 = scmp.lt.s32.totalorder %s17, 1
        %s173 = scalar_select %p172, %s17, 1
        %s174 = smul.addr %s173, 2
        %s175 = smul.addr %s174, 8
        %s176 = scalar_lea.vmem %s2, %s175
        %v177 = vld [vmem:[#allocation4] sm:$0x3f]
        %v178 = vld [vmem:[%s147] sm:$0xff]
        %v179 = vld [vmem:[%s147 + $0x8] sm:$0xff]
        %v180 = vld [vmem:[%s147 + $0x10] sm:$0xff]
        %v181 = vld [vmem:[%s147 + $0x18] sm:$0xff]
        %v182 = vld [vmem:[%s147 + $0x20] sm:$0xff]
        %v183 = vld [vmem:[%s147 + $0x28] sm:$0xff]
        %v184 = vcombine.low %v178, %v182
        %v185 = vcombine.high %v178, %v182
        %v187 = vunpack.c.l.s4 1983009808
        %v188 = vunpack.c.0.s8 %v187
        %v189 = vlaneseq
        %v190 = vshrl.u32 %v189, 7
        %v191 = vsub.s32 %v188, %v190
        %v192 = vrot.slane %v184, %v191
        %v194 = vunpack.c.l.s4 1983009808
        %v195 = vunpack.c.0.s8 %v194
        %v196 = vlaneseq
        %v197 = vshrl.u32 %v196, 7
        %v198 = vsub.s32 %v195, %v197
        %v199 = vrot.slane %v185, %v198
        %v200 = vcombine.high %v180, 0.0
        %v202 = vunpack.c.l.s4 1983009808
        %v203 = vunpack.c.0.s8 %v202
        %v204 = vlaneseq
        %v205 = vshrl.u32 %v204, 7
        %v206 = vsub.s32 %v203, %v205
        %v207 = vrot.slane %v180, %v206
        %v209 = vunpack.c.l.s4 1983009808
        %v210 = vunpack.c.0.s8 %v209
        %v211 = vlaneseq
        %v212 = vshrl.u32 %v211, 7
        %v213 = vsub.s32 %v210, %v212
        %v214 = vrot.slane %v200, %v213
        %v215 = vcombine.low %v192, %v207
        %v216 = vcombine.high %v192, %v207
        %v218 = vunpack.c.l.s4 1934713408
        %v219 = vunpack.c.0.s8 %v218
        %v220 = vlaneseq
        %v221 = vshrl.u32 %v220, 7
        %v222 = vsub.s32 %v219, %v221
        %v223 = vrot.slane %v215, %v222
        %v225 = vunpack.c.l.s4 1934713408
        %v226 = vunpack.c.0.s8 %v225
        %v227 = vlaneseq
        %v228 = vshrl.u32 %v227, 7
        %v229 = vsub.s32 %v226, %v228
        %v230 = vrot.slane %v216, %v229
        %v231 = vcombine.low %v199, %v214
        %v232 = vcombine.high %v199, %v214
        %v234 = vunpack.c.l.s4 1934713408
        %v235 = vunpack.c.0.s8 %v234
        %v236 = vlaneseq
        %v237 = vshrl.u32 %v236, 7
        %v238 = vsub.s32 %v235, %v237
        %v239 = vrot.slane %v231, %v238
        %v241 = vunpack.c.l.s4 1934713408
        %v242 = vunpack.c.0.s8 %v241
        %v243 = vlaneseq
        %v244 = vshrl.u32 %v243, 7
        %v245 = vsub.s32 %v242, %v244
        %v246 = vrot.slane %v232, %v245
        %v247 = vcombine.high %v223, 0.0
        %v248 = vcombine.high %v230, 0.0
        %v249 = vcombine.high %v239, 0.0
        %v250 = vcombine.high %v246, 0.0
        %v251 = vcombine.low %v179, %v183
        %v252 = vcombine.high %v179, %v183
        %v254 = vunpack.c.l.s4 1983009808
        %v255 = vunpack.c.0.s8 %v254
        %v256 = vlaneseq
        %v257 = vshrl.u32 %v256, 7
        %v258 = vsub.s32 %v255, %v257
        %v259 = vrot.slane %v251, %v258
        %v261 = vunpack.c.l.s4 1983009808
        %v262 = vunpack.c.0.s8 %v261
        %v263 = vlaneseq
        %v264 = vshrl.u32 %v263, 7
        %v265 = vsub.s32 %v262, %v264
        %v266 = vrot.slane %v252, %v265
        %v268 = vunpack.c.l.s4 1983009808
        %v269 = vunpack.c.0.s8 %v268
        %v270 = vlaneseq
        %v271 = vshrl.u32 %v270, 7
        %v272 = vsub.s32 %v269, %v271
        %v273 = vrot.slane %v181, %v272
        %v274 = vcombine.high %v181, 0.0
        %v275 = vcombine.low %v259, %v273
        %v276 = vcombine.high %v259, %v273
        %v278 = vunpack.c.l.s4 1934713408
        %v279 = vunpack.c.0.s8 %v278
        %v280 = vlaneseq
        %v281 = vshrl.u32 %v280, 7
        %v282 = vsub.s32 %v279, %v281
        %v283 = vrot.slane %v275, %v282
        %v285 = vunpack.c.l.s4 1934713408
        %v286 = vunpack.c.0.s8 %v285
        %v287 = vlaneseq
        %v288 = vshrl.u32 %v287, 7
        %v289 = vsub.s32 %v286, %v288
        %v290 = vrot.slane %v276, %v289
        %v291 = vcombine.low %v266, %v274
        %v293 = vunpack.c.l.s4 1934713408
        %v294 = vunpack.c.0.s8 %v293
        %v295 = vlaneseq
        %v296 = vshrl.u32 %v295, 7
        %v297 = vsub.s32 %v294, %v296
        %v298 = vrot.slane %v291, %v297
        %v299 = vcombine.high %v283, 0.0
        %v300 = vcombine.high %v290, 0.0
        %v301 = vcombine.high %v298, 0.0
        %303 = vrot.lane.b32.xlu0 %v247, 14
        %v304 = vpop.permute.xlu0 %303
        %307 = vrot.lane.b32.xlu0 %v230, 28
        %v308 = vpop.permute.xlu0 %307
        %311 = vrot.lane.b32.xlu0 %v248, 42
        %v312 = vpop.permute.xlu0 %311
        %315 = vrot.lane.b32.xlu0 %v239, 56
        %v316 = vpop.permute.xlu0 %315
        %319 = vrot.lane.b32.xlu0 %v249, 70
        %v320 = vpop.permute.xlu0 %319
        %323 = vrot.lane.b32.xlu0 %v246, 84
        %v324 = vpop.permute.xlu0 %323
        %327 = vrot.lane.b32.xlu0 %v250, 98
        %v328 = vpop.permute.xlu0 %327
        %331 = vrot.lane.b32.xlu0 %v283, 112
        %v332 = vpop.permute.xlu0 %331
        %335 = vrot.lane.b32.xlu0 %v299, 126
        %v336 = vpop.permute.xlu0 %335
        %339 = vrot.lane.b32.xlu0 %v290, 12
        %v340 = vpop.permute.xlu0 %339
        %343 = vrot.lane.b32.xlu0 %v300, 26
        %v344 = vpop.permute.xlu0 %343
        %347 = vrot.lane.b32.xlu0 %v298, 40
        %v348 = vpop.permute.xlu0 %347
        %351 = vrot.lane.b32.xlu0 %v301, 54
        %v352 = vpop.permute.xlu0 %351
        %vm354 = vcmask 113664
        %v355 = vsel %vm354, %v223, %v304
        %vm356 = vcmask 228352
        %v357 = vsel %vm356, %v355, %v308
        %vm358 = vcmask 343040
        %v359 = vsel %vm358, %v357, %v312
        %vm360 = vcmask 457728
        %v361 = vsel %vm360, %v359, %v316
        %vm362 = vcmask 572416
        %v363 = vsel %vm362, %v361, %v320
        %vm364 = vcmask 687104
        %v365 = vsel %vm364, %v363, %v324
        %vm366 = vcmask 801792
        %v367 = vsel %vm366, %v365, %v328
        %vm368 = vcmask 916480
        %v369 = vsel %vm368, %v367, %v332
        %vm370 = vcmask 1031168
        %v371 = vsel %vm370, %v369, %v336
        %vm372 = vcmask 97280
        %v373 = vsel %vm372, %v336, %v340
        %vm374 = vcmask 211968
        %v375 = vsel %vm374, %v373, %v344
        %vm376 = vcmask 326656
        %v377 = vsel %vm376, %v375, %v348
        %vm378 = vcmask 441344
        %v379 = vsel %vm378, %v377, %v352
        %386 = vrot.lane.b32.xlu0 %v178, 127
        %v387 = vpop.permute.xlu0 %386
        %388 = vrot.lane.b32.xlu0 %v179, 127
        %v389 = vpop.permute.xlu0 %388
        %390 = vrot.lane.b32.xlu0 %v180, 127
        %v391 = vpop.permute.xlu0 %390
        %392 = vrot.lane.b32.xlu0 %v181, 127
        %v393 = vpop.permute.xlu0 %392
        %394 = vrot.lane.b32.xlu0 %v182, 127
        %v395 = vpop.permute.xlu0 %394
        %396 = vrot.lane.b32.xlu0 %v183, 127
        %v397 = vpop.permute.xlu0 %396
        %v404 = vcombine.low %v387, %v395
        %v405 = vcombine.high %v387, %v395
        %v407 = vunpack.c.l.s4 1983009808
        %v408 = vunpack.c.0.s8 %v407
        %v409 = vlaneseq
        %v410 = vshrl.u32 %v409, 7
        %v411 = vsub.s32 %v408, %v410
        %v412 = vrot.slane %v404, %v411
        %v414 = vunpack.c.l.s4 1983009808
        %v415 = vunpack.c.0.s8 %v414
        %v416 = vlaneseq
        %v417 = vshrl.u32 %v416, 7
        %v418 = vsub.s32 %v415, %v417
        %v419 = vrot.slane %v405, %v418
        %v420 = vcombine.high %v391, 0.0
        %v422 = vunpack.c.l.s4 1983009808
        %v423 = vunpack.c.0.s8 %v422
        %v424 = vlaneseq
        %v425 = vshrl.u32 %v424, 7
        %v426 = vsub.s32 %v423, %v425
        %v427 = vrot.slane %v391, %v426
        %v429 = vunpack.c.l.s4 1983009808
        %v430 = vunpack.c.0.s8 %v429
        %v431 = vlaneseq
        %v432 = vshrl.u32 %v431, 7
        %v433 = vsub.s32 %v430, %v432
        %v434 = vrot.slane %v420, %v433
        %v435 = vcombine.low %v412, %v427
        %v436 = vcombine.high %v412, %v427
        %v438 = vunpack.c.l.s4 1934713408
        %v439 = vunpack.c.0.s8 %v438
        %v440 = vlaneseq
        %v441 = vshrl.u32 %v440, 7
        %v442 = vsub.s32 %v439, %v441
        %v443 = vrot.slane %v435, %v442
        %v445 = vunpack.c.l.s4 1934713408
        %v446 = vunpack.c.0.s8 %v445
        %v447 = vlaneseq
        %v448 = vshrl.u32 %v447, 7
        %v449 = vsub.s32 %v446, %v448
        %v450 = vrot.slane %v436, %v449
        %v451 = vcombine.low %v419, %v434
        %v452 = vcombine.high %v419, %v434
        %v454 = vunpack.c.l.s4 1934713408
        %v455 = vunpack.c.0.s8 %v454
        %v456 = vlaneseq
        %v457 = vshrl.u32 %v456, 7
        %v458 = vsub.s32 %v455, %v457
        %v459 = vrot.slane %v451, %v458
        %v461 = vunpack.c.l.s4 1934713408
        %v462 = vunpack.c.0.s8 %v461
        %v463 = vlaneseq
        %v464 = vshrl.u32 %v463, 7
        %v465 = vsub.s32 %v462, %v464
        %v466 = vrot.slane %v452, %v465
        %v467 = vcombine.high %v443, 0.0
        %v468 = vcombine.high %v450, 0.0
        %v469 = vcombine.high %v459, 0.0
        %v470 = vcombine.high %v466, 0.0
        %v471 = vcombine.low %v389, %v397
        %v472 = vcombine.high %v389, %v397
        %v474 = vunpack.c.l.s4 1983009808
        %v475 = vunpack.c.0.s8 %v474
        %v476 = vlaneseq
        %v477 = vshrl.u32 %v476, 7
        %v478 = vsub.s32 %v475, %v477
        %v479 = vrot.slane %v471, %v478
        %v481 = vunpack.c.l.s4 1983009808
        %v482 = vunpack.c.0.s8 %v481
        %v483 = vlaneseq
        %v484 = vshrl.u32 %v483, 7
        %v485 = vsub.s32 %v482, %v484
        %v486 = vrot.slane %v472, %v485
        %v488 = vunpack.c.l.s4 1983009808
        %v489 = vunpack.c.0.s8 %v488
        %v490 = vlaneseq
        %v491 = vshrl.u32 %v490, 7
        %v492 = vsub.s32 %v489, %v491
        %v493 = vrot.slane %v393, %v492
        %v494 = vcombine.high %v393, 0.0
        %v495 = vcombine.low %v479, %v493
        %v496 = vcombine.high %v479, %v493
        %v498 = vunpack.c.l.s4 1934713408
        %v499 = vunpack.c.0.s8 %v498
        %v500 = vlaneseq
        %v501 = vshrl.u32 %v500, 7
        %v502 = vsub.s32 %v499, %v501
        %v503 = vrot.slane %v495, %v502
        %v505 = vunpack.c.l.s4 1934713408
        %v506 = vunpack.c.0.s8 %v505
        %v507 = vlaneseq
        %v508 = vshrl.u32 %v507, 7
        %v509 = vsub.s32 %v506, %v508
        %v510 = vrot.slane %v496, %v509
        %v511 = vcombine.low %v486, %v494
        %v513 = vunpack.c.l.s4 1934713408
        %v514 = vunpack.c.0.s8 %v513
        %v515 = vlaneseq
        %v516 = vshrl.u32 %v515, 7
        %v517 = vsub.s32 %v514, %v516
        %v518 = vrot.slane %v511, %v517
        %v519 = vcombine.high %v503, 0.0
        %v520 = vcombine.high %v510, 0.0
        %v521 = vcombine.high %v518, 0.0
        %523 = vrot.lane.b32.xlu0 %v467, 14
        %v524 = vpop.permute.xlu0 %523
        %527 = vrot.lane.b32.xlu0 %v450, 28
        %v528 = vpop.permute.xlu0 %527
        %531 = vrot.lane.b32.xlu0 %v468, 42
        %v532 = vpop.permute.xlu0 %531
        %535 = vrot.lane.b32.xlu0 %v459, 56
        %v536 = vpop.permute.xlu0 %535
        %539 = vrot.lane.b32.xlu0 %v469, 70
        %v540 = vpop.permute.xlu0 %539
        %543 = vrot.lane.b32.xlu0 %v466, 84
        %v544 = vpop.permute.xlu0 %543
        %547 = vrot.lane.b32.xlu0 %v470, 98
        %v548 = vpop.permute.xlu0 %547
        %551 = vrot.lane.b32.xlu0 %v503, 112
        %v552 = vpop.permute.xlu0 %551
        %555 = vrot.lane.b32.xlu0 %v519, 126
        %v556 = vpop.permute.xlu0 %555
        %559 = vrot.lane.b32.xlu0 %v510, 12
        %v560 = vpop.permute.xlu0 %559
        %563 = vrot.lane.b32.xlu0 %v520, 26
        %v564 = vpop.permute.xlu0 %563
        %567 = vrot.lane.b32.xlu0 %v518, 40
        %v568 = vpop.permute.xlu0 %567
        %571 = vrot.lane.b32.xlu0 %v521, 54
        %v572 = vpop.permute.xlu0 %571
        %v574 = vsel %vm354, %v443, %v524
        %v575 = vsel %vm356, %v574, %v528
        %v576 = vsel %vm358, %v575, %v532
        %v577 = vsel %vm360, %v576, %v536
        %v578 = vsel %vm362, %v577, %v540
        %v579 = vsel %vm364, %v578, %v544
        %v580 = vsel %vm366, %v579, %v548
        %v581 = vsel %vm368, %v580, %v552
        %v582 = vsel %vm370, %v581, %v556
        %v583 = vsel %vm372, %v556, %v560
        %v584 = vsel %vm374, %v583, %v564
        %v585 = vsel %vm376, %v584, %v568
        %v586 = vsel %vm378, %v585, %v572
        %587 = vrot.lane.b32.xlu0 %v178, 126
        %v588 = vpop.permute.xlu0 %587
        %589 = vrot.lane.b32.xlu0 %v179, 126
        %v590 = vpop.permute.xlu0 %589
        %591 = vrot.lane.b32.xlu0 %v180, 126
        %v592 = vpop.permute.xlu0 %591
        %593 = vrot.lane.b32.xlu0 %v181, 126
        %v594 = vpop.permute.xlu0 %593
        %595 = vrot.lane.b32.xlu0 %v182, 126
        %v596 = vpop.permute.xlu0 %595
        %597 = vrot.lane.b32.xlu0 %v183, 126
        %v598 = vpop.permute.xlu0 %597
        %v605 = vcombine.low %v588, %v596
        %v606 = vcombine.high %v588, %v596
        %v608 = vunpack.c.l.s4 1983009808
        %v609 = vunpack.c.0.s8 %v608
        %v610 = vlaneseq
        %v611 = vshrl.u32 %v610, 7
        %v612 = vsub.s32 %v609, %v611
        %v613 = vrot.slane %v605, %v612
        %v615 = vunpack.c.l.s4 1983009808
        %v616 = vunpack.c.0.s8 %v615
        %v617 = vlaneseq
        %v618 = vshrl.u32 %v617, 7
        %v619 = vsub.s32 %v616, %v618
        %v620 = vrot.slane %v606, %v619
        %v621 = vcombine.high %v592, 0.0
        %v623 = vunpack.c.l.s4 1983009808
        %v624 = vunpack.c.0.s8 %v623
        %v625 = vlaneseq
        %v626 = vshrl.u32 %v625, 7
        %v627 = vsub.s32 %v624, %v626
        %v628 = vrot.slane %v592, %v627
        %v630 = vunpack.c.l.s4 1983009808
        %v631 = vunpack.c.0.s8 %v630
        %v632 = vlaneseq
        %v633 = vshrl.u32 %v632, 7
        %v634 = vsub.s32 %v631, %v633
        %v635 = vrot.slane %v621, %v634
        %v636 = vcombine.low %v613, %v628
        %v637 = vcombine.high %v613, %v628
        %v639 = vunpack.c.l.s4 1934713408
        %v640 = vunpack.c.0.s8 %v639
        %v641 = vlaneseq
        %v642 = vshrl.u32 %v641, 7
        %v643 = vsub.s32 %v640, %v642
        %v644 = vrot.slane %v636, %v643
        %v646 = vunpack.c.l.s4 1934713408
        %v647 = vunpack.c.0.s8 %v646
        %v648 = vlaneseq
        %v649 = vshrl.u32 %v648, 7
        %v650 = vsub.s32 %v647, %v649
        %v651 = vrot.slane %v637, %v650
        %v652 = vcombine.low %v620, %v635
        %v653 = vcombine.high %v620, %v635
        %v655 = vunpack.c.l.s4 1934713408
        %v656 = vunpack.c.0.s8 %v655
        %v657 = vlaneseq
        %v658 = vshrl.u32 %v657, 7
        %v659 = vsub.s32 %v656, %v658
        %v660 = vrot.slane %v652, %v659
        %v662 = vunpack.c.l.s4 1934713408
        %v663 = vunpack.c.0.s8 %v662
        %v664 = vlaneseq
        %v665 = vshrl.u32 %v664, 7
        %v666 = vsub.s32 %v663, %v665
        %v667 = vrot.slane %v653, %v666
        %v668 = vcombine.high %v644, 0.0
        %v669 = vcombine.high %v651, 0.0
        %v670 = vcombine.high %v660, 0.0
        %v671 = vcombine.high %v667, 0.0
        %v672 = vcombine.low %v590, %v598
        %v673 = vcombine.high %v590, %v598
        %v675 = vunpack.c.l.s4 1983009808
        %v676 = vunpack.c.0.s8 %v675
        %v677 = vlaneseq
        %v678 = vshrl.u32 %v677, 7
        %v679 = vsub.s32 %v676, %v678
        %v680 = vrot.slane %v672, %v679
        %v682 = vunpack.c.l.s4 1983009808
        %v683 = vunpack.c.0.s8 %v682
        %v684 = vlaneseq
        %v685 = vshrl.u32 %v684, 7
        %v686 = vsub.s32 %v683, %v685
        %v687 = vrot.slane %v673, %v686
        %v689 = vunpack.c.l.s4 1983009808
        %v690 = vunpack.c.0.s8 %v689
        %v691 = vlaneseq
        %v692 = vshrl.u32 %v691, 7
        %v693 = vsub.s32 %v690, %v692
        %v694 = vrot.slane %v594, %v693
        %v695 = vcombine.high %v594, 0.0
        %v696 = vcombine.low %v680, %v694
        %v697 = vcombine.high %v680, %v694
        %v699 = vunpack.c.l.s4 1934713408
        %v700 = vunpack.c.0.s8 %v699
        %v701 = vlaneseq
        %v702 = vshrl.u32 %v701, 7
        %v703 = vsub.s32 %v700, %v702
        %v704 = vrot.slane %v696, %v703
        %v706 = vunpack.c.l.s4 1934713408
        %v707 = vunpack.c.0.s8 %v706
        %v708 = vlaneseq
        %v709 = vshrl.u32 %v708, 7
        %v710 = vsub.s32 %v707, %v709
        %v711 = vrot.slane %v697, %v710
        %v712 = vcombine.low %v687, %v695
        %v714 = vunpack.c.l.s4 1934713408
        %v715 = vunpack.c.0.s8 %v714
        %v716 = vlaneseq
        %v717 = vshrl.u32 %v716, 7
        %v718 = vsub.s32 %v715, %v717
        %v719 = vrot.slane %v712, %v718
        %v720 = vcombine.high %v704, 0.0
        %v721 = vcombine.high %v711, 0.0
        %v722 = vcombine.high %v719, 0.0
        %724 = vrot.lane.b32.xlu0 %v668, 14
        %v725 = vpop.permute.xlu0 %724
        %728 = vrot.lane.b32.xlu0 %v651, 28
        %v729 = vpop.permute.xlu0 %728
        %732 = vrot.lane.b32.xlu0 %v669, 42
        %v733 = vpop.permute.xlu0 %732
        %736 = vrot.lane.b32.xlu0 %v660, 56
        %v737 = vpop.permute.xlu0 %736
        %740 = vrot.lane.b32.xlu0 %v670, 70
        %v741 = vpop.permute.xlu0 %740
        %744 = vrot.lane.b32.xlu0 %v667, 84
        %v745 = vpop.permute.xlu0 %744
        %748 = vrot.lane.b32.xlu0 %v671, 98
        %v749 = vpop.permute.xlu0 %748
        %752 = vrot.lane.b32.xlu0 %v704, 112
        %v753 = vpop.permute.xlu0 %752
        %756 = vrot.lane.b32.xlu0 %v720, 126
        %v757 = vpop.permute.xlu0 %756
        %760 = vrot.lane.b32.xlu0 %v711, 12
        %v761 = vpop.permute.xlu0 %760
        %764 = vrot.lane.b32.xlu0 %v721, 26
        %v765 = vpop.permute.xlu0 %764
        %768 = vrot.lane.b32.xlu0 %v719, 40
        %v769 = vpop.permute.xlu0 %768
        %772 = vrot.lane.b32.xlu0 %v722, 54
        %v773 = vpop.permute.xlu0 %772
        %v775 = vsel %vm354, %v644, %v725
        %v776 = vsel %vm356, %v775, %v729
        %v777 = vsel %vm358, %v776, %v733
        %v778 = vsel %vm360, %v777, %v737
        %v779 = vsel %vm362, %v778, %v741
        %v780 = vsel %vm364, %v779, %v745
        %v781 = vsel %vm366, %v780, %v749
        %v782 = vsel %vm368, %v781, %v753
        %v783 = vsel %vm370, %v782, %v757
        %v784 = vsel %vm372, %v757, %v761
        %v785 = vsel %vm374, %v784, %v765
        %v786 = vsel %vm376, %v785, %v769
        %v787 = vsel %vm378, %v786, %v773
        %vm788 = vcmask 1046528
        %v789 = vrot.slane %v178, 1
        %v790 = vrot.slane %v179, 1
        %v791 = vsel %vm788, %v789, %v790
        %v792 = vrot.slane %v180, 1
        %v793 = vrot.slane %v181, 1
        %v794 = vsel %vm788, %v792, %v793
        %v795 = vrot.slane %v182, 1
        %v796 = vrot.slane %v183, 1
        %v797 = vsel %vm788, %v795, %v796
        %v804 = vcombine.low %v791, %v797
        %v805 = vcombine.high %v791, %v797
        %v807 = vunpack.c.l.s4 1983009808
        %v808 = vunpack.c.0.s8 %v807
        %v809 = vlaneseq
        %v810 = vshrl.u32 %v809, 7
        %v811 = vsub.s32 %v808, %v810
        %v812 = vrot.slane %v804, %v811
        %v814 = vunpack.c.l.s4 1983009808
        %v815 = vunpack.c.0.s8 %v814
        %v816 = vlaneseq
        %v817 = vshrl.u32 %v816, 7
        %v818 = vsub.s32 %v815, %v817
        %v819 = vrot.slane %v805, %v818
        %v820 = vcombine.high %v794, 0.0
        %v822 = vunpack.c.l.s4 1983009808
        %v823 = vunpack.c.0.s8 %v822
        %v824 = vlaneseq
        %v825 = vshrl.u32 %v824, 7
        %v826 = vsub.s32 %v823, %v825
        %v827 = vrot.slane %v794, %v826
        %v829 = vunpack.c.l.s4 1983009808
        %v830 = vunpack.c.0.s8 %v829
        %v831 = vlaneseq
        %v832 = vshrl.u32 %v831, 7
        %v833 = vsub.s32 %v830, %v832
        %v834 = vrot.slane %v820, %v833
        %v835 = vcombine.low %v812, %v827
        %v836 = vcombine.high %v812, %v827
        %v838 = vunpack.c.l.s4 1934713408
        %v839 = vunpack.c.0.s8 %v838
        %v840 = vlaneseq
        %v841 = vshrl.u32 %v840, 7
        %v842 = vsub.s32 %v839, %v841
        %v843 = vrot.slane %v835, %v842
        %v845 = vunpack.c.l.s4 1934713408
        %v846 = vunpack.c.0.s8 %v845
        %v847 = vlaneseq
        %v848 = vshrl.u32 %v847, 7
        %v849 = vsub.s32 %v846, %v848
        %v850 = vrot.slane %v836, %v849
        %v851 = vcombine.low %v819, %v834
        %v852 = vcombine.high %v819, %v834
        %v854 = vunpack.c.l.s4 1934713408
        %v855 = vunpack.c.0.s8 %v854
        %v856 = vlaneseq
        %v857 = vshrl.u32 %v856, 7
        %v858 = vsub.s32 %v855, %v857
        %v859 = vrot.slane %v851, %v858
        %v861 = vunpack.c.l.s4 1934713408
        %v862 = vunpack.c.0.s8 %v861
        %v863 = vlaneseq
        %v864 = vshrl.u32 %v863, 7
        %v865 = vsub.s32 %v862, %v864
        %v866 = vrot.slane %v852, %v865
        %v867 = vcombine.high %v843, 0.0
        %v868 = vcombine.high %v850, 0.0
        %v869 = vcombine.high %v859, 0.0
        %v870 = vcombine.high %v866, 0.0
        %v871 = vcombine.low %v790, %v796
        %v872 = vcombine.high %v790, %v796
        %v874 = vunpack.c.l.s4 1983009808
        %v875 = vunpack.c.0.s8 %v874
        %v876 = vlaneseq
        %v877 = vshrl.u32 %v876, 7
        %v878 = vsub.s32 %v875, %v877
        %v879 = vrot.slane %v871, %v878
        %v881 = vunpack.c.l.s4 1983009808
        %v882 = vunpack.c.0.s8 %v881
        %v883 = vlaneseq
        %v884 = vshrl.u32 %v883, 7
        %v885 = vsub.s32 %v882, %v884
        %v886 = vrot.slane %v872, %v885
        %v888 = vunpack.c.l.s4 1983009808
        %v889 = vunpack.c.0.s8 %v888
        %v890 = vlaneseq
        %v891 = vshrl.u32 %v890, 7
        %v892 = vsub.s32 %v889, %v891
        %v893 = vrot.slane %v793, %v892
        %v894 = vcombine.high %v793, 0.0
        %v895 = vcombine.low %v879, %v893
        %v896 = vcombine.high %v879, %v893
        %v898 = vunpack.c.l.s4 1934713408
        %v899 = vunpack.c.0.s8 %v898
        %v900 = vlaneseq
        %v901 = vshrl.u32 %v900, 7
        %v902 = vsub.s32 %v899, %v901
        %v903 = vrot.slane %v895, %v902
        %v905 = vunpack.c.l.s4 1934713408
        %v906 = vunpack.c.0.s8 %v905
        %v907 = vlaneseq
        %v908 = vshrl.u32 %v907, 7
        %v909 = vsub.s32 %v906, %v908
        %v910 = vrot.slane %v896, %v909
        %v911 = vcombine.low %v886, %v894
        %v913 = vunpack.c.l.s4 1934713408
        %v914 = vunpack.c.0.s8 %v913
        %v915 = vlaneseq
        %v916 = vshrl.u32 %v915, 7
        %v917 = vsub.s32 %v914, %v916
        %v918 = vrot.slane %v911, %v917
        %v919 = vcombine.high %v903, 0.0
        %v920 = vcombine.high %v910, 0.0
        %v921 = vcombine.high %v918, 0.0
        %923 = vrot.lane.b32.xlu0 %v867, 14
        %v924 = vpop.permute.xlu0 %923
        %927 = vrot.lane.b32.xlu0 %v850, 28
        %v928 = vpop.permute.xlu0 %927
        %931 = vrot.lane.b32.xlu0 %v868, 42
        %v932 = vpop.permute.xlu0 %931
        %935 = vrot.lane.b32.xlu0 %v859, 56
        %v936 = vpop.permute.xlu0 %935
        %939 = vrot.lane.b32.xlu0 %v869, 70
        %v940 = vpop.permute.xlu0 %939
        %943 = vrot.lane.b32.xlu0 %v866, 84
        %v944 = vpop.permute.xlu0 %943
        %947 = vrot.lane.b32.xlu0 %v870, 98
        %v948 = vpop.permute.xlu0 %947
        %951 = vrot.lane.b32.xlu0 %v903, 112
        %v952 = vpop.permute.xlu0 %951
        %955 = vrot.lane.b32.xlu0 %v919, 126
        %v956 = vpop.permute.xlu0 %955
        %959 = vrot.lane.b32.xlu0 %v910, 12
        %v960 = vpop.permute.xlu0 %959
        %963 = vrot.lane.b32.xlu0 %v920, 26
        %v964 = vpop.permute.xlu0 %963
        %967 = vrot.lane.b32.xlu0 %v918, 40
        %v968 = vpop.permute.xlu0 %967
        %971 = vrot.lane.b32.xlu0 %v921, 54
        %v972 = vpop.permute.xlu0 %971
        %v974 = vsel %vm354, %v843, %v924
        %v975 = vsel %vm356, %v974, %v928
        %v976 = vsel %vm358, %v975, %v932
        %v977 = vsel %vm360, %v976, %v936
        %v978 = vsel %vm362, %v977, %v940
        %v979 = vsel %vm364, %v978, %v944
        %v980 = vsel %vm366, %v979, %v948
        %v981 = vsel %vm368, %v980, %v952
        %v982 = vsel %vm370, %v981, %v956
        %v983 = vsel %vm372, %v956, %v960
        %v984 = vsel %vm374, %v983, %v964
        %v985 = vsel %vm376, %v984, %v968
        %v986 = vsel %vm378, %v985, %v972
        %987 = vrot.lane.b32.xlu0 %v791, 127
        %v988 = vpop.permute.xlu0 %987
        %989 = vrot.lane.b32.xlu0 %v790, 127
        %v990 = vpop.permute.xlu0 %989
        %991 = vrot.lane.b32.xlu0 %v794, 127
        %v992 = vpop.permute.xlu0 %991
        %993 = vrot.lane.b32.xlu0 %v793, 127
        %v994 = vpop.permute.xlu0 %993
        %995 = vrot.lane.b32.xlu0 %v797, 127
        %v996 = vpop.permute.xlu0 %995
        %997 = vrot.lane.b32.xlu0 %v796, 127
        %v998 = vpop.permute.xlu0 %997
        %v1005 = vcombine.low %v988, %v996
        %v1006 = vcombine.high %v988, %v996
        %v1008 = vunpack.c.l.s4 1983009808
        %v1009 = vunpack.c.0.s8 %v1008
        %v1010 = vlaneseq
        %v1011 = vshrl.u32 %v1010, 7
        %v1012 = vsub.s32 %v1009, %v1011
        %v1013 = vrot.slane %v1005, %v1012
        %v1015 = vunpack.c.l.s4 1983009808
        %v1016 = vunpack.c.0.s8 %v1015
        %v1017 = vlaneseq
        %v1018 = vshrl.u32 %v1017, 7
        %v1019 = vsub.s32 %v1016, %v1018
        %v1020 = vrot.slane %v1006, %v1019
        %v1021 = vcombine.high %v992, 0.0
        %v1023 = vunpack.c.l.s4 1983009808
        %v1024 = vunpack.c.0.s8 %v1023
        %v1025 = vlaneseq
        %v1026 = vshrl.u32 %v1025, 7
        %v1027 = vsub.s32 %v1024, %v1026
        %v1028 = vrot.slane %v992, %v1027
        %v1030 = vunpack.c.l.s4 1983009808
        %v1031 = vunpack.c.0.s8 %v1030
        %v1032 = vlaneseq
        %v1033 = vshrl.u32 %v1032, 7
        %v1034 = vsub.s32 %v1031, %v1033
        %v1035 = vrot.slane %v1021, %v1034
        %v1036 = vcombine.low %v1013, %v1028
        %v1037 = vcombine.high %v1013, %v1028
        %v1039 = vunpack.c.l.s4 1934713408
        %v1040 = vunpack.c.0.s8 %v1039
        %v1041 = vlaneseq
        %v1042 = vshrl.u32 %v1041, 7
        %v1043 = vsub.s32 %v1040, %v1042
        %v1044 = vrot.slane %v1036, %v1043
        %v1046 = vunpack.c.l.s4 1934713408
        %v1047 = vunpack.c.0.s8 %v1046
        %v1048 = vlaneseq
        %v1049 = vshrl.u32 %v1048, 7
        %v1050 = vsub.s32 %v1047, %v1049
        %v1051 = vrot.slane %v1037, %v1050
        %v1052 = vcombine.low %v1020, %v1035
        %v1053 = vcombine.high %v1020, %v1035
        %v1055 = vunpack.c.l.s4 1934713408
        %v1056 = vunpack.c.0.s8 %v1055
        %v1057 = vlaneseq
        %v1058 = vshrl.u32 %v1057, 7
        %v1059 = vsub.s32 %v1056, %v1058
        %v1060 = vrot.slane %v1052, %v1059
        %v1062 = vunpack.c.l.s4 1934713408
        %v1063 = vunpack.c.0.s8 %v1062
        %v1064 = vlaneseq
        %v1065 = vshrl.u32 %v1064, 7
        %v1066 = vsub.s32 %v1063, %v1065
        %v1067 = vrot.slane %v1053, %v1066
        %v1068 = vcombine.high %v1044, 0.0
        %v1069 = vcombine.high %v1051, 0.0
        %v1070 = vcombine.high %v1060, 0.0
        %v1071 = vcombine.high %v1067, 0.0
        %v1072 = vcombine.low %v990, %v998
        %v1073 = vcombine.high %v990, %v998
        %v1075 = vunpack.c.l.s4 1983009808
        %v1076 = vunpack.c.0.s8 %v1075
        %v1077 = vlaneseq
        %v1078 = vshrl.u32 %v1077, 7
        %v1079 = vsub.s32 %v1076, %v1078
        %v1080 = vrot.slane %v1072, %v1079
        %v1082 = vunpack.c.l.s4 1983009808
        %v1083 = vunpack.c.0.s8 %v1082
        %v1084 = vlaneseq
        %v1085 = vshrl.u32 %v1084, 7
        %v1086 = vsub.s32 %v1083, %v1085
        %v1087 = vrot.slane %v1073, %v1086
        %v1089 = vunpack.c.l.s4 1983009808
        %v1090 = vunpack.c.0.s8 %v1089
        %v1091 = vlaneseq
        %v1092 = vshrl.u32 %v1091, 7
        %v1093 = vsub.s32 %v1090, %v1092
        %v1094 = vrot.slane %v994, %v1093
        %v1095 = vcombine.high %v994, 0.0
        %v1096 = vcombine.low %v1080, %v1094
        %v1097 = vcombine.high %v1080, %v1094
        %v1099 = vunpack.c.l.s4 1934713408
        %v1100 = vunpack.c.0.s8 %v1099
        %v1101 = vlaneseq
        %v1102 = vshrl.u32 %v1101, 7
        %v1103 = vsub.s32 %v1100, %v1102
        %v1104 = vrot.slane %v1096, %v1103
        %v1106 = vunpack.c.l.s4 1934713408
        %v1107 = vunpack.c.0.s8 %v1106
        %v1108 = vlaneseq
        %v1109 = vshrl.u32 %v1108, 7
        %v1110 = vsub.s32 %v1107, %v1109
        %v1111 = vrot.slane %v1097, %v1110
        %v1112 = vcombine.low %v1087, %v1095
        %v1114 = vunpack.c.l.s4 1934713408
        %v1115 = vunpack.c.0.s8 %v1114
        %v1116 = vlaneseq
        %v1117 = vshrl.u32 %v1116, 7
        %v1118 = vsub.s32 %v1115, %v1117
        %v1119 = vrot.slane %v1112, %v1118
        %v1120 = vcombine.high %v1104, 0.0
        %v1121 = vcombine.high %v1111, 0.0
        %v1122 = vcombine.high %v1119, 0.0
        %1124 = vrot.lane.b32.xlu0 %v1068, 14
        %v1125 = vpop.permute.xlu0 %1124
        %1128 = vrot.lane.b32.xlu0 %v1051, 28
        %v1129 = vpop.permute.xlu0 %1128
        %1132 = vrot.lane.b32.xlu0 %v1069, 42
        %v1133 = vpop.permute.xlu0 %1132
        %1136 = vrot.lane.b32.xlu0 %v1060, 56
        %v1137 = vpop.permute.xlu0 %1136
        %1140 = vrot.lane.b32.xlu0 %v1070, 70
        %v1141 = vpop.permute.xlu0 %1140
        %1144 = vrot.lane.b32.xlu0 %v1067, 84
        %v1145 = vpop.permute.xlu0 %1144
        %1148 = vrot.lane.b32.xlu0 %v1071, 98
        %v1149 = vpop.permute.xlu0 %1148
        %1152 = vrot.lane.b32.xlu0 %v1104, 112
        %v1153 = vpop.permute.xlu0 %1152
        %1156 = vrot.lane.b32.xlu0 %v1120, 126
        %v1157 = vpop.permute.xlu0 %1156
        %1160 = vrot.lane.b32.xlu0 %v1111, 12
        %v1161 = vpop.permute.xlu0 %1160
        %1164 = vrot.lane.b32.xlu0 %v1121, 26
        %v1165 = vpop.permute.xlu0 %1164
        %1168 = vrot.lane.b32.xlu0 %v1119, 40
        %v1169 = vpop.permute.xlu0 %1168
        %1172 = vrot.lane.b32.xlu0 %v1122, 54
        %v1173 = vpop.permute.xlu0 %1172
        %v1175 = vsel %vm354, %v1044, %v1125
        %v1176 = vsel %vm356, %v1175, %v1129
        %v1177 = vsel %vm358, %v1176, %v1133
        %v1178 = vsel %vm360, %v1177, %v1137
        %v1179 = vsel %vm362, %v1178, %v1141
        %v1180 = vsel %vm364, %v1179, %v1145
        %v1181 = vsel %vm366, %v1180, %v1149
        %v1182 = vsel %vm368, %v1181, %v1153
        %v1183 = vsel %vm370, %v1182, %v1157
        %v1184 = vsel %vm372, %v1157, %v1161
        %v1185 = vsel %vm374, %v1184, %v1165
        %v1186 = vsel %vm376, %v1185, %v1169
        %v1187 = vsel %vm378, %v1186, %v1173
        %1188 = vrot.lane.b32.xlu0 %v791, 126
        %v1189 = vpop.permute.xlu0 %1188
        %1190 = vrot.lane.b32.xlu0 %v790, 126
        %v1191 = vpop.permute.xlu0 %1190
        %1192 = vrot.lane.b32.xlu0 %v794, 126
        %v1193 = vpop.permute.xlu0 %1192
        %1194 = vrot.lane.b32.xlu0 %v793, 126
        %v1195 = vpop.permute.xlu0 %1194
        %1196 = vrot.lane.b32.xlu0 %v797, 126
        %v1197 = vpop.permute.xlu0 %1196
        %1198 = vrot.lane.b32.xlu0 %v796, 126
        %v1199 = vpop.permute.xlu0 %1198
        %v1206 = vcombine.low %v1189, %v1197
        %v1207 = vcombine.high %v1189, %v1197
        %v1209 = vunpack.c.l.s4 1983009808
        %v1210 = vunpack.c.0.s8 %v1209
        %v1211 = vlaneseq
        %v1212 = vshrl.u32 %v1211, 7
        %v1213 = vsub.s32 %v1210, %v1212
        %v1214 = vrot.slane %v1206, %v1213
        %v1216 = vunpack.c.l.s4 1983009808
        %v1217 = vunpack.c.0.s8 %v1216
        %v1218 = vlaneseq
        %v1219 = vshrl.u32 %v1218, 7
        %v1220 = vsub.s32 %v1217, %v1219
        %v1221 = vrot.slane %v1207, %v1220
        %v1222 = vcombine.high %v1193, 0.0
        %v1224 = vunpack.c.l.s4 1983009808
        %v1225 = vunpack.c.0.s8 %v1224
        %v1226 = vlaneseq
        %v1227 = vshrl.u32 %v1226, 7
        %v1228 = vsub.s32 %v1225, %v1227
        %v1229 = vrot.slane %v1193, %v1228
        %v1231 = vunpack.c.l.s4 1983009808
        %v1232 = vunpack.c.0.s8 %v1231
        %v1233 = vlaneseq
        %v1234 = vshrl.u32 %v1233, 7
        %v1235 = vsub.s32 %v1232, %v1234
        %v1236 = vrot.slane %v1222, %v1235
        %v1237 = vcombine.low %v1214, %v1229
        %v1238 = vcombine.high %v1214, %v1229
        %v1240 = vunpack.c.l.s4 1934713408
        %v1241 = vunpack.c.0.s8 %v1240
        %v1242 = vlaneseq
        %v1243 = vshrl.u32 %v1242, 7
        %v1244 = vsub.s32 %v1241, %v1243
        %v1245 = vrot.slane %v1237, %v1244
        %v1247 = vunpack.c.l.s4 1934713408
        %v1248 = vunpack.c.0.s8 %v1247
        %v1249 = vlaneseq
        %v1250 = vshrl.u32 %v1249, 7
        %v1251 = vsub.s32 %v1248, %v1250
        %v1252 = vrot.slane %v1238, %v1251
        %v1253 = vcombine.low %v1221, %v1236
        %v1254 = vcombine.high %v1221, %v1236
        %v1256 = vunpack.c.l.s4 1934713408
        %v1257 = vunpack.c.0.s8 %v1256
        %v1258 = vlaneseq
        %v1259 = vshrl.u32 %v1258, 7
        %v1260 = vsub.s32 %v1257, %v1259
        %v1261 = vrot.slane %v1253, %v1260
        %v1263 = vunpack.c.l.s4 1934713408
        %v1264 = vunpack.c.0.s8 %v1263
        %v1265 = vlaneseq
        %v1266 = vshrl.u32 %v1265, 7
        %v1267 = vsub.s32 %v1264, %v1266
        %v1268 = vrot.slane %v1254, %v1267
        %v1269 = vcombine.high %v1245, 0.0
        %v1270 = vcombine.high %v1252, 0.0
        %v1271 = vcombine.high %v1261, 0.0
        %v1272 = vcombine.high %v1268, 0.0
        %v1273 = vcombine.low %v1191, %v1199
        %v1274 = vcombine.high %v1191, %v1199
        %v1276 = vunpack.c.l.s4 1983009808
        %v1277 = vunpack.c.0.s8 %v1276
        %v1278 = vlaneseq
        %v1279 = vshrl.u32 %v1278, 7
        %v1280 = vsub.s32 %v1277, %v1279
        %v1281 = vrot.slane %v1273, %v1280
        %v1283 = vunpack.c.l.s4 1983009808
        %v1284 = vunpack.c.0.s8 %v1283
        %v1285 = vlaneseq
        %v1286 = vshrl.u32 %v1285, 7
        %v1287 = vsub.s32 %v1284, %v1286
        %v1288 = vrot.slane %v1274, %v1287
        %v1290 = vunpack.c.l.s4 1983009808
        %v1291 = vunpack.c.0.s8 %v1290
        %v1292 = vlaneseq
        %v1293 = vshrl.u32 %v1292, 7
        %v1294 = vsub.s32 %v1291, %v1293
        %v1295 = vrot.slane %v1195, %v1294
        %v1296 = vcombine.high %v1195, 0.0
        %v1297 = vcombine.low %v1281, %v1295
        %v1298 = vcombine.high %v1281, %v1295
        %v1300 = vunpack.c.l.s4 1934713408
        %v1301 = vunpack.c.0.s8 %v1300
        %v1302 = vlaneseq
        %v1303 = vshrl.u32 %v1302, 7
        %v1304 = vsub.s32 %v1301, %v1303
        %v1305 = vrot.slane %v1297, %v1304
        %v1307 = vunpack.c.l.s4 1934713408
        %v1308 = vunpack.c.0.s8 %v1307
        %v1309 = vlaneseq
        %v1310 = vshrl.u32 %v1309, 7
        %v1311 = vsub.s32 %v1308, %v1310
        %v1312 = vrot.slane %v1298, %v1311
        %v1313 = vcombine.low %v1288, %v1296
        %v1315 = vunpack.c.l.s4 1934713408
        %v1316 = vunpack.c.0.s8 %v1315
        %v1317 = vlaneseq
        %v1318 = vshrl.u32 %v1317, 7
        %v1319 = vsub.s32 %v1316, %v1318
        %v1320 = vrot.slane %v1313, %v1319
        %v1321 = vcombine.high %v1305, 0.0
        %v1322 = vcombine.high %v1312, 0.0
        %v1323 = vcombine.high %v1320, 0.0
        %1325 = vrot.lane.b32.xlu0 %v1269, 14
        %v1326 = vpop.permute.xlu0 %1325
        %1329 = vrot.lane.b32.xlu0 %v1252, 28
        %v1330 = vpop.permute.xlu0 %1329
        %1333 = vrot.lane.b32.xlu0 %v1270, 42
        %v1334 = vpop.permute.xlu0 %1333
        %1337 = vrot.lane.b32.xlu0 %v1261, 56
        %v1338 = vpop.permute.xlu0 %1337
        %1341 = vrot.lane.b32.xlu0 %v1271, 70
        %v1342 = vpop.permute.xlu0 %1341
        %1345 = vrot.lane.b32.xlu0 %v1268, 84
        %v1346 = vpop.permute.xlu0 %1345
        %1349 = vrot.lane.b32.xlu0 %v1272, 98
        %v1350 = vpop.permute.xlu0 %1349
        %1353 = vrot.lane.b32.xlu0 %v1305, 112
        %v1354 = vpop.permute.xlu0 %1353
        %1357 = vrot.lane.b32.xlu0 %v1321, 126
        %v1358 = vpop.permute.xlu0 %1357
        %1361 = vrot.lane.b32.xlu0 %v1312, 12
        %v1362 = vpop.permute.xlu0 %1361
        %1365 = vrot.lane.b32.xlu0 %v1322, 26
        %v1366 = vpop.permute.xlu0 %1365
        %1369 = vrot.lane.b32.xlu0 %v1320, 40
        %v1370 = vpop.permute.xlu0 %1369
        %1373 = vrot.lane.b32.xlu0 %v1323, 54
        %v1374 = vpop.permute.xlu0 %1373
        %v1376 = vsel %vm354, %v1245, %v1326
        %v1377 = vsel %vm356, %v1376, %v1330
        %v1378 = vsel %vm358, %v1377, %v1334
        %v1379 = vsel %vm360, %v1378, %v1338
        %v1380 = vsel %vm362, %v1379, %v1342
        %v1381 = vsel %vm364, %v1380, %v1346
        %v1382 = vsel %vm366, %v1381, %v1350
        %v1383 = vsel %vm368, %v1382, %v1354
        %v1384 = vsel %vm370, %v1383, %v1358
        %v1385 = vsel %vm372, %v1358, %v1362
        %v1386 = vsel %vm374, %v1385, %v1366
        %v1387 = vsel %vm376, %v1386, %v1370
        %v1388 = vsel %vm378, %v1387, %v1374
        %vm1389 = vcmask 1045504
        %v1390 = vrot.slane %v178, 2
        %v1391 = vrot.slane %v179, 2
        %v1392 = vsel %vm1389, %v1390, %v1391
        %v1393 = vrot.slane %v180, 2
        %v1394 = vrot.slane %v181, 2
        %v1395 = vsel %vm1389, %v1393, %v1394
        %v1396 = vrot.slane %v182, 2
        %v1397 = vrot.slane %v183, 2
        %v1398 = vsel %vm1389, %v1396, %v1397
        %v1405 = vcombine.low %v1392, %v1398
        %v1406 = vcombine.high %v1392, %v1398
        %v1408 = vunpack.c.l.s4 1983009808
        %v1409 = vunpack.c.0.s8 %v1408
        %v1410 = vlaneseq
        %v1411 = vshrl.u32 %v1410, 7
        %v1412 = vsub.s32 %v1409, %v1411
        %v1413 = vrot.slane %v1405, %v1412
        %v1415 = vunpack.c.l.s4 1983009808
        %v1416 = vunpack.c.0.s8 %v1415
        %v1417 = vlaneseq
        %v1418 = vshrl.u32 %v1417, 7
        %v1419 = vsub.s32 %v1416, %v1418
        %v1420 = vrot.slane %v1406, %v1419
        %v1421 = vcombine.high %v1395, 0.0
        %v1423 = vunpack.c.l.s4 1983009808
        %v1424 = vunpack.c.0.s8 %v1423
        %v1425 = vlaneseq
        %v1426 = vshrl.u32 %v1425, 7
        %v1427 = vsub.s32 %v1424, %v1426
        %v1428 = vrot.slane %v1395, %v1427
        %v1430 = vunpack.c.l.s4 1983009808
        %v1431 = vunpack.c.0.s8 %v1430
        %v1432 = vlaneseq
        %v1433 = vshrl.u32 %v1432, 7
        %v1434 = vsub.s32 %v1431, %v1433
        %v1435 = vrot.slane %v1421, %v1434
        %v1436 = vcombine.low %v1413, %v1428
        %v1437 = vcombine.high %v1413, %v1428
        %v1439 = vunpack.c.l.s4 1934713408
        %v1440 = vunpack.c.0.s8 %v1439
        %v1441 = vlaneseq
        %v1442 = vshrl.u32 %v1441, 7
        %v1443 = vsub.s32 %v1440, %v1442
        %v1444 = vrot.slane %v1436, %v1443
        %v1446 = vunpack.c.l.s4 1934713408
        %v1447 = vunpack.c.0.s8 %v1446
        %v1448 = vlaneseq
        %v1449 = vshrl.u32 %v1448, 7
        %v1450 = vsub.s32 %v1447, %v1449
        %v1451 = vrot.slane %v1437, %v1450
        %v1452 = vcombine.low %v1420, %v1435
        %v1453 = vcombine.high %v1420, %v1435
        %v1455 = vunpack.c.l.s4 1934713408
        %v1456 = vunpack.c.0.s8 %v1455
        %v1457 = vlaneseq
        %v1458 = vshrl.u32 %v1457, 7
        %v1459 = vsub.s32 %v1456, %v1458
        %v1460 = vrot.slane %v1452, %v1459
        %v1462 = vunpack.c.l.s4 1934713408
        %v1463 = vunpack.c.0.s8 %v1462
        %v1464 = vlaneseq
        %v1465 = vshrl.u32 %v1464, 7
        %v1466 = vsub.s32 %v1463, %v1465
        %v1467 = vrot.slane %v1453, %v1466
        %v1468 = vcombine.high %v1444, 0.0
        %v1469 = vcombine.high %v1451, 0.0
        %v1470 = vcombine.high %v1460, 0.0
        %v1471 = vcombine.high %v1467, 0.0
        %v1472 = vcombine.low %v1391, %v1397
        %v1473 = vcombine.high %v1391, %v1397
        %v1475 = vunpack.c.l.s4 1983009808
        %v1476 = vunpack.c.0.s8 %v1475
        %v1477 = vlaneseq
        %v1478 = vshrl.u32 %v1477, 7
        %v1479 = vsub.s32 %v1476, %v1478
        %v1480 = vrot.slane %v1472, %v1479
        %v1482 = vunpack.c.l.s4 1983009808
        %v1483 = vunpack.c.0.s8 %v1482
        %v1484 = vlaneseq
        %v1485 = vshrl.u32 %v1484, 7
        %v1486 = vsub.s32 %v1483, %v1485
        %v1487 = vrot.slane %v1473, %v1486
        %v1489 = vunpack.c.l.s4 1983009808
        %v1490 = vunpack.c.0.s8 %v1489
        %v1491 = vlaneseq
        %v1492 = vshrl.u32 %v1491, 7
        %v1493 = vsub.s32 %v1490, %v1492
        %v1494 = vrot.slane %v1394, %v1493
        %v1495 = vcombine.high %v1394, 0.0
        %v1496 = vcombine.low %v1480, %v1494
        %v1497 = vcombine.high %v1480, %v1494
        %v1499 = vunpack.c.l.s4 1934713408
        %v1500 = vunpack.c.0.s8 %v1499
        %v1501 = vlaneseq
        %v1502 = vshrl.u32 %v1501, 7
        %v1503 = vsub.s32 %v1500, %v1502
        %v1504 = vrot.slane %v1496, %v1503
        %v1506 = vunpack.c.l.s4 1934713408
        %v1507 = vunpack.c.0.s8 %v1506
        %v1508 = vlaneseq
        %v1509 = vshrl.u32 %v1508, 7
        %v1510 = vsub.s32 %v1507, %v1509
        %v1511 = vrot.slane %v1497, %v1510
        %v1512 = vcombine.low %v1487, %v1495
        %v1514 = vunpack.c.l.s4 1934713408
        %v1515 = vunpack.c.0.s8 %v1514
        %v1516 = vlaneseq
        %v1517 = vshrl.u32 %v1516, 7
        %v1518 = vsub.s32 %v1515, %v1517
        %v1519 = vrot.slane %v1512, %v1518
        %v1520 = vcombine.high %v1504, 0.0
        %v1521 = vcombine.high %v1511, 0.0
        %v1522 = vcombine.high %v1519, 0.0
        %1524 = vrot.lane.b32.xlu0 %v1468, 14
        %v1525 = vpop.permute.xlu0 %1524
        %1528 = vrot.lane.b32.xlu0 %v1451, 28
        %v1529 = vpop.permute.xlu0 %1528
        %1532 = vrot.lane.b32.xlu0 %v1469, 42
        %v1533 = vpop.permute.xlu0 %1532
        %1536 = vrot.lane.b32.xlu0 %v1460, 56
        %v1537 = vpop.permute.xlu0 %1536
        %1540 = vrot.lane.b32.xlu0 %v1470, 70
        %v1541 = vpop.permute.xlu0 %1540
        %1544 = vrot.lane.b32.xlu0 %v1467, 84
        %v1545 = vpop.permute.xlu0 %1544
        %1548 = vrot.lane.b32.xlu0 %v1471, 98
        %v1549 = vpop.permute.xlu0 %1548
        %1552 = vrot.lane.b32.xlu0 %v1504, 112
        %v1553 = vpop.permute.xlu0 %1552
        %1556 = vrot.lane.b32.xlu0 %v1520, 126
        %v1557 = vpop.permute.xlu0 %1556
        %1560 = vrot.lane.b32.xlu0 %v1511, 12
        %v1561 = vpop.permute.xlu0 %1560
        %1564 = vrot.lane.b32.xlu0 %v1521, 26
        %v1565 = vpop.permute.xlu0 %1564
        %1568 = vrot.lane.b32.xlu0 %v1519, 40
        %v1569 = vpop.permute.xlu0 %1568
        %1572 = vrot.lane.b32.xlu0 %v1522, 54
        %v1573 = vpop.permute.xlu0 %1572
        %v1575 = vsel %vm354, %v1444, %v1525
        %v1576 = vsel %vm356, %v1575, %v1529
        %v1577 = vsel %vm358, %v1576, %v1533
        %v1578 = vsel %vm360, %v1577, %v1537
        %v1579 = vsel %vm362, %v1578, %v1541
        %v1580 = vsel %vm364, %v1579, %v1545
        %v1581 = vsel %vm366, %v1580, %v1549
        %v1582 = vsel %vm368, %v1581, %v1553
        %v1583 = vsel %vm370, %v1582, %v1557
        %v1584 = vsel %vm372, %v1557, %v1561
        %v1585 = vsel %vm374, %v1584, %v1565
        %v1586 = vsel %vm376, %v1585, %v1569
        %v1587 = vsel %vm378, %v1586, %v1573
        %1588 = vrot.lane.b32.xlu0 %v1392, 127
        %v1589 = vpop.permute.xlu0 %1588
        %1590 = vrot.lane.b32.xlu0 %v1391, 127
        %v1591 = vpop.permute.xlu0 %1590
        %1592 = vrot.lane.b32.xlu0 %v1395, 127
        %v1593 = vpop.permute.xlu0 %1592
        %1594 = vrot.lane.b32.xlu0 %v1394, 127
        %v1595 = vpop.permute.xlu0 %1594
        %1596 = vrot.lane.b32.xlu0 %v1398, 127
        %v1597 = vpop.permute.xlu0 %1596
        %1598 = vrot.lane.b32.xlu0 %v1397, 127
        %v1599 = vpop.permute.xlu0 %1598
        %v1606 = vcombine.low %v1589, %v1597
        %v1607 = vcombine.high %v1589, %v1597
        %v1609 = vunpack.c.l.s4 1983009808
        %v1610 = vunpack.c.0.s8 %v1609
        %v1611 = vlaneseq
        %v1612 = vshrl.u32 %v1611, 7
        %v1613 = vsub.s32 %v1610, %v1612
        %v1614 = vrot.slane %v1606, %v1613
        %v1616 = vunpack.c.l.s4 1983009808
        %v1617 = vunpack.c.0.s8 %v1616
        %v1618 = vlaneseq
        %v1619 = vshrl.u32 %v1618, 7
        %v1620 = vsub.s32 %v1617, %v1619
        %v1621 = vrot.slane %v1607, %v1620
        %v1622 = vcombine.high %v1593, 0.0
        %v1624 = vunpack.c.l.s4 1983009808
        %v1625 = vunpack.c.0.s8 %v1624
        %v1626 = vlaneseq
        %v1627 = vshrl.u32 %v1626, 7
        %v1628 = vsub.s32 %v1625, %v1627
        %v1629 = vrot.slane %v1593, %v1628
        %v1631 = vunpack.c.l.s4 1983009808
        %v1632 = vunpack.c.0.s8 %v1631
        %v1633 = vlaneseq
        %v1634 = vshrl.u32 %v1633, 7
        %v1635 = vsub.s32 %v1632, %v1634
        %v1636 = vrot.slane %v1622, %v1635
        %v1637 = vcombine.low %v1614, %v1629
        %v1638 = vcombine.high %v1614, %v1629
        %v1640 = vunpack.c.l.s4 1934713408
        %v1641 = vunpack.c.0.s8 %v1640
        %v1642 = vlaneseq
        %v1643 = vshrl.u32 %v1642, 7
        %v1644 = vsub.s32 %v1641, %v1643
        %v1645 = vrot.slane %v1637, %v1644
        %v1647 = vunpack.c.l.s4 1934713408
        %v1648 = vunpack.c.0.s8 %v1647
        %v1649 = vlaneseq
        %v1650 = vshrl.u32 %v1649, 7
        %v1651 = vsub.s32 %v1648, %v1650
        %v1652 = vrot.slane %v1638, %v1651
        %v1653 = vcombine.low %v1621, %v1636
        %v1654 = vcombine.high %v1621, %v1636
        %v1656 = vunpack.c.l.s4 1934713408
        %v1657 = vunpack.c.0.s8 %v1656
        %v1658 = vlaneseq
        %v1659 = vshrl.u32 %v1658, 7
        %v1660 = vsub.s32 %v1657, %v1659
        %v1661 = vrot.slane %v1653, %v1660
        %v1663 = vunpack.c.l.s4 1934713408
        %v1664 = vunpack.c.0.s8 %v1663
        %v1665 = vlaneseq
        %v1666 = vshrl.u32 %v1665, 7
        %v1667 = vsub.s32 %v1664, %v1666
        %v1668 = vrot.slane %v1654, %v1667
        %v1669 = vcombine.high %v1645, 0.0
        %v1670 = vcombine.high %v1652, 0.0
        %v1671 = vcombine.high %v1661, 0.0
        %v1672 = vcombine.high %v1668, 0.0
        %v1673 = vcombine.low %v1591, %v1599
        %v1674 = vcombine.high %v1591, %v1599
        %v1676 = vunpack.c.l.s4 1983009808
        %v1677 = vunpack.c.0.s8 %v1676
        %v1678 = vlaneseq
        %v1679 = vshrl.u32 %v1678, 7
        %v1680 = vsub.s32 %v1677, %v1679
        %v1681 = vrot.slane %v1673, %v1680
        %v1683 = vunpack.c.l.s4 1983009808
        %v1684 = vunpack.c.0.s8 %v1683
        %v1685 = vlaneseq
        %v1686 = vshrl.u32 %v1685, 7
        %v1687 = vsub.s32 %v1684, %v1686
        %v1688 = vrot.slane %v1674, %v1687
        %v1690 = vunpack.c.l.s4 1983009808
        %v1691 = vunpack.c.0.s8 %v1690
        %v1692 = vlaneseq
        %v1693 = vshrl.u32 %v1692, 7
        %v1694 = vsub.s32 %v1691, %v1693
        %v1695 = vrot.slane %v1595, %v1694
        %v1696 = vcombine.high %v1595, 0.0
        %v1697 = vcombine.low %v1681, %v1695
        %v1698 = vcombine.high %v1681, %v1695
        %v1700 = vunpack.c.l.s4 1934713408
        %v1701 = vunpack.c.0.s8 %v1700
        %v1702 = vlaneseq
        %v1703 = vshrl.u32 %v1702, 7
        %v1704 = vsub.s32 %v1701, %v1703
        %v1705 = vrot.slane %v1697, %v1704
        %v1707 = vunpack.c.l.s4 1934713408
        %v1708 = vunpack.c.0.s8 %v1707
        %v1709 = vlaneseq
        %v1710 = vshrl.u32 %v1709, 7
        %v1711 = vsub.s32 %v1708, %v1710
        %v1712 = vrot.slane %v1698, %v1711
        %v1713 = vcombine.low %v1688, %v1696
        %v1715 = vunpack.c.l.s4 1934713408
        %v1716 = vunpack.c.0.s8 %v1715
        %v1717 = vlaneseq
        %v1718 = vshrl.u32 %v1717, 7
        %v1719 = vsub.s32 %v1716, %v1718
        %v1720 = vrot.slane %v1713, %v1719
        %v1721 = vcombine.high %v1705, 0.0
        %v1722 = vcombine.high %v1712, 0.0
        %v1723 = vcombine.high %v1720, 0.0
        %1725 = vrot.lane.b32.xlu0 %v1669, 14
        %v1726 = vpop.permute.xlu0 %1725
        %1729 = vrot.lane.b32.xlu0 %v1652, 28
        %v1730 = vpop.permute.xlu0 %1729
        %1733 = vrot.lane.b32.xlu0 %v1670, 42
        %v1734 = vpop.permute.xlu0 %1733
        %1737 = vrot.lane.b32.xlu0 %v1661, 56
        %v1738 = vpop.permute.xlu0 %1737
        %1741 = vrot.lane.b32.xlu0 %v1671, 70
        %v1742 = vpop.permute.xlu0 %1741
        %1745 = vrot.lane.b32.xlu0 %v1668, 84
        %v1746 = vpop.permute.xlu0 %1745
        %1749 = vrot.lane.b32.xlu0 %v1672, 98
        %v1750 = vpop.permute.xlu0 %1749
        %1753 = vrot.lane.b32.xlu0 %v1705, 112
        %v1754 = vpop.permute.xlu0 %1753
        %1757 = vrot.lane.b32.xlu0 %v1721, 126
        %v1758 = vpop.permute.xlu0 %1757
        %1761 = vrot.lane.b32.xlu0 %v1712, 12
        %v1762 = vpop.permute.xlu0 %1761
        %1765 = vrot.lane.b32.xlu0 %v1722, 26
        %v1766 = vpop.permute.xlu0 %1765
        %1769 = vrot.lane.b32.xlu0 %v1720, 40
        %v1770 = vpop.permute.xlu0 %1769
        %1773 = vrot.lane.b32.xlu0 %v1723, 54
        %v1774 = vpop.permute.xlu0 %1773
        %v1776 = vsel %vm354, %v1645, %v1726
        %v1777 = vsel %vm356, %v1776, %v1730
        %v1778 = vsel %vm358, %v1777, %v1734
        %v1779 = vsel %vm360, %v1778, %v1738
        %v1780 = vsel %vm362, %v1779, %v1742
        %v1781 = vsel %vm364, %v1780, %v1746
        %v1782 = vsel %vm366, %v1781, %v1750
        %v1783 = vsel %vm368, %v1782, %v1754
        %v1784 = vsel %vm370, %v1783, %v1758
        %v1785 = vsel %vm372, %v1758, %v1762
        %v1786 = vsel %vm374, %v1785, %v1766
        %v1787 = vsel %vm376, %v1786, %v1770
        %v1788 = vsel %vm378, %v1787, %v1774
        %1789 = vrot.lane.b32.xlu0 %v1392, 126
        %v1790 = vpop.permute.xlu0 %1789
        %1791 = vrot.lane.b32.xlu0 %v1391, 126
        %v1792 = vpop.permute.xlu0 %1791
        %1793 = vrot.lane.b32.xlu0 %v1395, 126
        %v1794 = vpop.permute.xlu0 %1793
        %1795 = vrot.lane.b32.xlu0 %v1394, 126
        %v1796 = vpop.permute.xlu0 %1795
        %1797 = vrot.lane.b32.xlu0 %v1398, 126
        %v1798 = vpop.permute.xlu0 %1797
        %1799 = vrot.lane.b32.xlu0 %v1397, 126
        %v1800 = vpop.permute.xlu0 %1799
        %v1807 = vcombine.low %v1790, %v1798
        %v1808 = vcombine.high %v1790, %v1798
        %v1810 = vunpack.c.l.s4 1983009808
        %v1811 = vunpack.c.0.s8 %v1810
        %v1812 = vlaneseq
        %v1813 = vshrl.u32 %v1812, 7
        %v1814 = vsub.s32 %v1811, %v1813
        %v1815 = vrot.slane %v1807, %v1814
        %v1817 = vunpack.c.l.s4 1983009808
        %v1818 = vunpack.c.0.s8 %v1817
        %v1819 = vlaneseq
        %v1820 = vshrl.u32 %v1819, 7
        %v1821 = vsub.s32 %v1818, %v1820
        %v1822 = vrot.slane %v1808, %v1821
        %v1823 = vcombine.high %v1794, 0.0
        %v1825 = vunpack.c.l.s4 1983009808
        %v1826 = vunpack.c.0.s8 %v1825
        %v1827 = vlaneseq
        %v1828 = vshrl.u32 %v1827, 7
        %v1829 = vsub.s32 %v1826, %v1828
        %v1830 = vrot.slane %v1794, %v1829
        %v1832 = vunpack.c.l.s4 1983009808
        %v1833 = vunpack.c.0.s8 %v1832
        %v1834 = vlaneseq
        %v1835 = vshrl.u32 %v1834, 7
        %v1836 = vsub.s32 %v1833, %v1835
        %v1837 = vrot.slane %v1823, %v1836
        %v1838 = vcombine.low %v1815, %v1830
        %v1839 = vcombine.high %v1815, %v1830
        %v1841 = vunpack.c.l.s4 1934713408
        %v1842 = vunpack.c.0.s8 %v1841
        %v1843 = vlaneseq
        %v1844 = vshrl.u32 %v1843, 7
        %v1845 = vsub.s32 %v1842, %v1844
        %v1846 = vrot.slane %v1838, %v1845
        %v1848 = vunpack.c.l.s4 1934713408
        %v1849 = vunpack.c.0.s8 %v1848
        %v1850 = vlaneseq
        %v1851 = vshrl.u32 %v1850, 7
        %v1852 = vsub.s32 %v1849, %v1851
        %v1853 = vrot.slane %v1839, %v1852
        %v1854 = vcombine.low %v1822, %v1837
        %v1855 = vcombine.high %v1822, %v1837
        %v1857 = vunpack.c.l.s4 1934713408
        %v1858 = vunpack.c.0.s8 %v1857
        %v1859 = vlaneseq
        %v1860 = vshrl.u32 %v1859, 7
        %v1861 = vsub.s32 %v1858, %v1860
        %v1862 = vrot.slane %v1854, %v1861
        %v1864 = vunpack.c.l.s4 1934713408
        %v1865 = vunpack.c.0.s8 %v1864
        %v1866 = vlaneseq
        %v1867 = vshrl.u32 %v1866, 7
        %v1868 = vsub.s32 %v1865, %v1867
        %v1869 = vrot.slane %v1855, %v1868
        %v1870 = vcombine.high %v1846, 0.0
        %v1871 = vcombine.high %v1853, 0.0
        %v1872 = vcombine.high %v1862, 0.0
        %v1873 = vcombine.high %v1869, 0.0
        %v1874 = vcombine.low %v1792, %v1800
        %v1875 = vcombine.high %v1792, %v1800
        %v1877 = vunpack.c.l.s4 1983009808
        %v1878 = vunpack.c.0.s8 %v1877
        %v1879 = vlaneseq
        %v1880 = vshrl.u32 %v1879, 7
        %v1881 = vsub.s32 %v1878, %v1880
        %v1882 = vrot.slane %v1874, %v1881
        %v1884 = vunpack.c.l.s4 1983009808
        %v1885 = vunpack.c.0.s8 %v1884
        %v1886 = vlaneseq
        %v1887 = vshrl.u32 %v1886, 7
        %v1888 = vsub.s32 %v1885, %v1887
        %v1889 = vrot.slane %v1875, %v1888
        %v1891 = vunpack.c.l.s4 1983009808
        %v1892 = vunpack.c.0.s8 %v1891
        %v1893 = vlaneseq
        %v1894 = vshrl.u32 %v1893, 7
        %v1895 = vsub.s32 %v1892, %v1894
        %v1896 = vrot.slane %v1796, %v1895
        %v1897 = vcombine.high %v1796, 0.0
        %v1898 = vcombine.low %v1882, %v1896
        %v1899 = vcombine.high %v1882, %v1896
        %v1901 = vunpack.c.l.s4 1934713408
        %v1902 = vunpack.c.0.s8 %v1901
        %v1903 = vlaneseq
        %v1904 = vshrl.u32 %v1903, 7
        %v1905 = vsub.s32 %v1902, %v1904
        %v1906 = vrot.slane %v1898, %v1905
        %v1908 = vunpack.c.l.s4 1934713408
        %v1909 = vunpack.c.0.s8 %v1908
        %v1910 = vlaneseq
        %v1911 = vshrl.u32 %v1910, 7
        %v1912 = vsub.s32 %v1909, %v1911
        %v1913 = vrot.slane %v1899, %v1912
        %v1914 = vcombine.low %v1889, %v1897
        %v1916 = vunpack.c.l.s4 1934713408
        %v1917 = vunpack.c.0.s8 %v1916
        %v1918 = vlaneseq
        %v1919 = vshrl.u32 %v1918, 7
        %v1920 = vsub.s32 %v1917, %v1919
        %v1921 = vrot.slane %v1914, %v1920
        %v1922 = vcombine.high %v1906, 0.0
        %v1923 = vcombine.high %v1913, 0.0
        %v1924 = vcombine.high %v1921, 0.0
        %1926 = vrot.lane.b32.xlu0 %v1870, 14
        %v1927 = vpop.permute.xlu0 %1926
        %1930 = vrot.lane.b32.xlu0 %v1853, 28
        %v1931 = vpop.permute.xlu0 %1930
        %1934 = vrot.lane.b32.xlu0 %v1871, 42
        %v1935 = vpop.permute.xlu0 %1934
        %1938 = vrot.lane.b32.xlu0 %v1862, 56
        %v1939 = vpop.permute.xlu0 %1938
        %1942 = vrot.lane.b32.xlu0 %v1872, 70
        %v1943 = vpop.permute.xlu0 %1942
        %1946 = vrot.lane.b32.xlu0 %v1869, 84
        %v1947 = vpop.permute.xlu0 %1946
        %1950 = vrot.lane.b32.xlu0 %v1873, 98
        %v1951 = vpop.permute.xlu0 %1950
        %1954 = vrot.lane.b32.xlu0 %v1906, 112
        %v1955 = vpop.permute.xlu0 %1954
        %1958 = vrot.lane.b32.xlu0 %v1922, 126
        %v1959 = vpop.permute.xlu0 %1958
        %1962 = vrot.lane.b32.xlu0 %v1913, 12
        %v1963 = vpop.permute.xlu0 %1962
        %1966 = vrot.lane.b32.xlu0 %v1923, 26
        %v1967 = vpop.permute.xlu0 %1966
        %1970 = vrot.lane.b32.xlu0 %v1921, 40
        %v1971 = vpop.permute.xlu0 %1970
        %1974 = vrot.lane.b32.xlu0 %v1924, 54
        %v1975 = vpop.permute.xlu0 %1974
        %v1977 = vsel %vm354, %v1846, %v1927
        %v1978 = vsel %vm356, %v1977, %v1931
        %v1979 = vsel %vm358, %v1978, %v1935
        %v1980 = vsel %vm360, %v1979, %v1939
        %v1981 = vsel %vm362, %v1980, %v1943
        %v1982 = vsel %vm364, %v1981, %v1947
        %v1983 = vsel %vm366, %v1982, %v1951
        %v1984 = vsel %vm368, %v1983, %v1955
        %v1985 = vsel %vm370, %v1984, %v1959
        %v1986 = vsel %vm372, %v1959, %v1963
        %v1987 = vsel %vm374, %v1986, %v1967
        %v1988 = vsel %vm376, %v1987, %v1971
        %v1989 = vsel %vm378, %v1988, %v1975
        %v1992 = vrot.slane %v582, 5
        %v1993 = vrot.slane %v586, 5
        %v1998 = vrot.slane %v783, 2
        %v1999 = vrot.slane %v787, 2
        %v2004 = vrot.slane %v982, 7
        %v2005 = vrot.slane %v986, 7
        %v2010 = vrot.slane %v1183, 4
        %v2011 = vrot.slane %v1187, 4
        %v2016 = vrot.slane %v1384, 1
        %v2017 = vrot.slane %v1388, 1
        %v2022 = vrot.slane %v1583, 6
        %v2023 = vrot.slane %v1587, 6
        %v2028 = vrot.slane %v1784, 3
        %v2029 = vrot.slane %v1788, 3
        %vm2032 = vcmask 1042432
        %v2033 = vsel %vm2032, %v371, %v1992
        %v2034 = vsel %vm2032, %v379, %v1993
        %v2035 = vsel %vm1389, %v2033, %v1998
        %v2036 = vsel %vm1389, %v2034, %v1999
        %vm2037 = vcmask 1040384
        %v2038 = vsel %vm2037, %v1998, %v2004
        %v2039 = vsel %vm2037, %v1999, %v2005
        %vm2040 = vcmask 1043456
        %v2041 = vsel %vm2040, %v2038, %v2010
        %v2042 = vsel %vm2040, %v2039, %v2011
        %v2043 = vsel %vm788, %v2041, %v2016
        %v2044 = vsel %vm788, %v2042, %v2017
        %vm2045 = vcmask 1041408
        %v2046 = vsel %vm2045, %v2016, %v2022
        %v2047 = vsel %vm2045, %v2017, %v2023
        %vm2048 = vcmask 1044480
        %v2049 = vsel %vm2048, %v2046, %v2028
        %v2050 = vsel %vm2048, %v2047, %v2029
        %v2051 = vsel %vm2032, %v1985, 1.0
        %v2052 = vsel %vm2032, %v1989, 1.0
        %v2054 = vsel %vm356, %v177, 0
        %v2057 = vsel %vm2040, %v2051, 0
        %v2060 = vsel %vm2040, %v2052, 0
        %2062 = vmatprep.subr.mxu0 %v2036
        %2063 = vmatpush1.msra.mxu0 %v2035
        %2064 = vmatprep.subr.mxu0 %v2044
        %2065 = vmatpush1.msra.mxu0 %v2043
        %2066 = vmatprep.subr.mxu0 %v2050
        %2067 = vmatpush1.msra.mxu0 %v2049
        %2068 = vmatprep.subr.mxu0 %v2060
        %2069 = vmatpush1.msra.mxu0 %v2057
        %2070 = vmatprep.subr.mxu0 0.0
        %2071 = vmatpush1.msra.mxu0 0.0
        %2072 = vmatprep.subr.mxu0 0.0
        %2073 = vmatpush1.msra.mxu0 0.0
        %2074 = vmatprep.subr.mxu0 0.0
        %2075 = vmatpush1.msra.mxu0 0.0
        %2076 = vmatprep.subr.mxu0 0.0
        %2077 = vmatpush1.msra.mxu0 0.0
        %2078 = vmatprep.subr.mxu0 0.0
        %2079 = vmatpush1.msra.mxu0 0.0
        %2080 = vmatprep.subr.mxu0 0.0
        %2081 = vmatpush1.msra.mxu0 0.0
        %2082 = vmatprep.subr.mxu0 0.0
        %2083 = vmatpush1.msra.mxu0 0.0
        %2084 = vmatprep.subr.mxu0 0.0
        %2085 = vmatpush1.msra.mxu0 0.0
        %2086 = vmatprep.subr.mxu0 0.0
        %2087 = vmatpush1.msra.mxu0 0.0
        %2088 = vmatprep.subr.mxu0 0.0
        %2089 = vmatpush1.msra.mxu0 0.0
        %2090 = vmatprep.subr.mxu0 0.0
        %2091 = vmatpush1.msra.mxu0 0.0
        %2092 = vmatprep.subr.mxu0 0.0
        %2093 = vmatpush1.msra.mxu0 0.0
        %2094 = vmatprep.subr.mxu0 0.0
        %2095 = vmatpush1.msra.mxu0 0.0
        %2096 = vmatprep.subr.mxu0 0.0
        %2097 = vmatpush1.msra.mxu0 0.0
        %2098 = vmatprep.subr.mxu0 0.0
        %2099 = vmatpush1.msra.mxu0 0.0
        %2100 = vmatprep.subr.mxu0 0.0
        %2101 = vmatpush1.msra.mxu0 0.0
        %2102 = vmatprep.subr.mxu0 0.0
        %2103 = vmatpush1.msra.mxu0 0.0
        %2104 = vmatprep.subr.mxu0 0.0
        %2105 = vmatpush1.msra.mxu0 0.0
        %2106 = vmatprep.subr.mxu0 0.0
        %2107 = vmatpush1.msra.mxu0 0.0
        %2108 = vmatprep.subr.mxu0 0.0
        %2109 = vmatpush1.msra.mxu0 0.0
        %2110 = vmatprep.subr.mxu0 0.0
        %2111 = vmatpush1.msra.mxu0 0.0
        %2112 = vmatprep.subr.mxu0 0.0
        %2113 = vmatpush1.msra.mxu0 0.0
        %2114 = vmatprep.subr.mxu0 0.0
        %2115 = vmatpush1.msra.mxu0 0.0
        %2116 = vmatprep.subr.mxu0 0.0
        %2117 = vmatpush1.msra.mxu0 0.0
        %2118 = vmatprep.subr.mxu0 0.0
        %2119 = vmatpush1.msra.mxu0 0.0
        %2120 = vmatprep.subr.mxu0 0.0
        %2121 = vmatpush1.msra.mxu0 0.0
        %2122 = vmatprep.subr.mxu0 0.0
        %2123 = vmatpush1.msra.mxu0 0.0
        %2124 = vmatprep.subr.mxu0 0.0
        %2125 = vmatpush1.msra.mxu0 0.0
        %2126 = vmatprep.mubr.f32.mxu0 0.0
        %2127 = vmatmul.mubr.f32.gmra.mrb[0].mxu0 %v2054
        %v2128 = vpop.f32.mrb[0].mxu0
        %v2129 = vadd.f32 0.0, %v2128
        %v2130 = vpop.f32.mrb[0].mxu0
        %v2131 = vadd.f32 0.0, %v2130
        %2132 = vdwg.mxu0
        %2133 = vst [vmem:[%s176] sm:$0x3f] %v2129
        %vm2134 = vcmask 553984
        %2135 = vst.msk [vmem:[%s176 + $0x8] sm:$0x3f] %vm2134, %v2131
        %p2136 = scmp.lt.s32.totalorder %s17, 1
        %s2137 = scalar_select %p2136, %s17, 1
        %s2138 = smul.addr %s2137, 2
        %s2139 = smul.addr %s2138, 8
        %s2140 = scalar_lea.vmem %s2, %s2139
        // Predicated region
        $region37: #{tpu_custom_call.1} parent=27 // pred_check
          %p2141 = pneg %p82
        $region38: #{tpu_custom_call.1} parent=27 // pred_check_branch
          %2143 = sbr.rel (%p2141) target = $region40
        $region39: #{tpu_custom_call.1} parent=27 // pred_region
          _
        $region40: #{tpu_custom_call.1} parent=27 // pred_fallthru
          _
      $region28: #{tpu_custom_call.1} parent=5 // pred_fallthru
        _
      %p2144 = scmp.le.s32.totalorder 2, %s12
      // Predicated region
      $region41: #{tpu_custom_call.1} parent=5 // pred_check
        %p2145 = pneg %p2144
      $region42: #{tpu_custom_call.1} parent=5 // pred_check_branch
        %2147 = sbr.rel (%p2145) target = $region44
      $region43: #{tpu_custom_call.1} parent=5 // pred_region
        %s2148 = ssub.s32 %s12, 2
        // Predicated region
        $region45: #{tpu_custom_call.1} parent=43 // pred_check
          %p2149 = pneg %p88
        $region46: #{tpu_custom_call.1} parent=43 // pred_check_branch
          %2151 = sbr.rel (%p2149) target = $region48
        $region47: #{tpu_custom_call.1} parent=43 // pred_region
          %p2152 = scmp.lt.s32.totalorder %s18, 1
          %s2153 = scalar_select %p2152, %s18, 1
          %s2154 = smul.addr %s2153, 2
          %s2155 = smul.addr %s2154, 8
          %s2156 = scalar_lea.vmem %s2, %s2155
        $region48: #{tpu_custom_call.1} parent=43 // pred_fallthru
          _
      $region44: #{tpu_custom_call.1} parent=5 // pred_fallthru
        _
    $region6: #{tpu_custom_call.1} parent=1 // loop_footer
      %s16 = sadd.s32 1, %s12
    $region7: #{tpu_custom_call.1} parent=1 // loop_footer_branch
      %11 = sbr.rel target = $region3
    $region8: #{tpu_custom_call.1} parent=1 // loop_exit
      _
    %2157 = vsyncpa [#allocation3], 1
    %s2158 = scalar_lea.sflag [#allocation3], 1
    %2159 = vsyncpa %s2158, 1
    %2160 = vsyncpa [#allocation5], 1

</llo_original>
